<compile_context>
chip_gen: v6e
topology: v6e:2x2x1
jax: 0.10.0
libtpu: 0.0.40
codegen_flags: <defaults>
</compile_context>

<pallas_src>
import functools

import jax
import jax.numpy as jnp
from jax.experimental import pallas as pl
from jax.experimental.pallas import tpu as pltpu


CP = 128  # backbone output-channel dims padded to one full lane width


# ----------------------------- Fused Pallas kernel ------------------------------

def fused_forward_kernel(
    x_ref,        # (block_rows, Cin)  bf16  one batch element's spatial row block
    convw0_ref,   # (Cin, CP)          bf16  first 1x1-conv weight (true input width)
    convw_ref,    # (L-1, CP, CP)      bf16  remaining 1x1-conv weights, zero-padded
    convb_ref,    # (L, 1, CP)         f32   conv biases, zero-padded
    tailw_ref,    # (CP, (L+1)*K)      f32   [centroid_0 | ... | centroid_{L-1} | cls_w]
    c2_ref,       # (L, K)             f32   precomputed ||centroid||^2 per layer
    clsb_ref,     # (1, K)             f32   classifier_1 Linear bias
    wih_ref,      # (K, 4H)            f32   LSTM W_ih^T, gate order i|f|g|o along lanes
    whh_ref,      # (H, 4H)            f32   LSTM W_hh^T
    lstmb_ref,    # (1, 4H)            f32   b_ih + b_hh
    detw_ref,     # (1, H)             f32   detector classifier weight
    detb_ref,     # (1, 1)             f32
    out_ref,      # (1, 128)           f32   lanes [0:K] logits, lane K detector score
    pooled_acc,   # (L, CP)            f32   VMEM scratch: per-layer GAP running sums
    *, n_layers, hw, hidden, n_classes,
):
    L, K, H = n_layers, n_classes, hidden
    r = pl.program_id(1)
    n_r = pl.num_programs(1)

    @pl.when(r == 0)
    def _init():
        pooled_acc[...] = jnp.zeros_like(pooled_acc)

    # ---- backbone on this row block: conv1x1 + ReLU stack, bf16 MXU / f32 acc ----
    cur = x_ref[...]                                   # (block_rows, Cin) bf16
    psums = []
    for l in range(L):
        w = convw0_ref[...] if l == 0 else convw_ref[l - 1]
        y = jnp.dot(cur, w, preferred_element_type=jnp.float32)
        y = jnp.maximum(y + convb_ref[l], 0.0)         # (block_rows, CP) f32
        # partial GAP: plain axis-0 reduce, no reshape (block = one batch element)
        psums.append(jnp.sum(y, axis=0, keepdims=True))
        if l + 1 < L:                                  # last layer: skip the bf16 cast/store
            cur = y.astype(jnp.bfloat16)
    pooled_acc[...] += jnp.concatenate(psums, axis=0)  # (L, CP)

    # ---- tail: only on the last row block of this batch element ----
    @pl.when(r == n_r - 1)
    def _tail():
        pooled = pooled_acc[...] * (1.0 / float(hw))   # (L, CP) f32  per-layer GAP

        # One stacked MXU dot covers all embedder centroid products + classifier.
        big = jnp.dot(pooled, tailw_ref[...],
                      preferred_element_type=jnp.float32)          # (L, (L+1)*K)
        logits = big[L - 1:L, L * K:(L + 1) * K] + clsb_ref[...]   # (1, K)

        # Embedder (euclidean): ||x_l - c_{l,k}||, block-diagonal extraction of x.c
        xc = jnp.concatenate(
            [big[l:l + 1, l * K:(l + 1) * K] for l in range(L)], axis=0)  # (L, K)
        x2 = jnp.sum(pooled * pooled, axis=-1, keepdims=True)             # (L, 1)
        d = jnp.sqrt(jnp.maximum(x2 + c2_ref[...] - 2.0 * xc, 0.0))       # (L, K)

        # Detector LSTM over the layer trajectory (batch_first, unidirectional).
        def sigmoid(v):
            return pl.reciprocal(1.0 + jnp.exp(-v), approx=True)  # EUP exp + rcp

        # x @ W_ih for ALL timesteps in one dot; only h @ W_hh stays on the chain.
        xw = jnp.dot(d, wih_ref[...], preferred_element_type=jnp.float32) \
            + lstmb_ref[...]                                       # (L, 4H)
        h = jnp.zeros((1, H), jnp.float32)
        c = jnp.zeros((1, H), jnp.float32)
        for t in range(L):                                         # small, static
            gates = xw[t:t + 1, :] + jnp.dot(h, whh_ref[...],
                                             preferred_element_type=jnp.float32)
            i_g = sigmoid(gates[:, 0:H])                           # PyTorch order i,f,g,o
            f_g = sigmoid(gates[:, H:2 * H])
            g_g = jnp.tanh(gates[:, 2 * H:3 * H])
            o_g = sigmoid(gates[:, 3 * H:4 * H])
            c = f_g * c + i_g * g_g
            h = o_g * jnp.tanh(c)

        # output[:, -1] == final hidden state; Linear(H, 1) as a VPU mul + reduce.
        det = jnp.sum(h * detw_ref[...], axis=-1, keepdims=True) + detb_ref[...]

        pad = jnp.zeros((1, out_ref.shape[-1] - K - 1), jnp.float32)
        out_ref[...] = jnp.concatenate([logits, det, pad], axis=-1)


# ------------------------------ JAX wrapper --------------------------------

def threatened_model_forward(x, fp, *, block_rows=None):
    """Mirrors ThreatenedModelVGGFace.forward(x, return_trajectory=False).

    x: (B, C_in, H, W) NCHW f32.  One entry-time layout conversion to a compact
    (B, H*W, C_in) bf16 slab (no channel padding); everything else runs inside a
    single fused, gridded Pallas kernel.
    """
    B, Cin, Himg, Wimg = x.shape
    HW = Himg * Wimg
    L = fp["convb"].shape[0]
    K = fp["clsb"].shape[1]
    hidden = fp["whh"].shape[0]

    if block_rows is None:
        # >=512-row streams per weight load keep the MXU busy on v6e/v7x.
        block_rows = 512 if HW % 512 == 0 else HW
    assert HW % block_rows == 0, (HW, block_rows)

    xr = jnp.transpose(x, (0, 2, 3, 1)).reshape(B, HW, Cin).astype(jnp.bfloat16)

    kernel = functools.partial(
        fused_forward_kernel, n_layers=L, hw=HW, hidden=hidden, n_classes=K)

    out = pl.pallas_call(
        kernel,
        out_shape=jax.ShapeDtypeStruct((B, 1, 128), jnp.float32),
        grid_spec=pltpu.PrefetchScalarGridSpec(
            num_scalar_prefetch=0,
            grid=(B, HW // block_rows),
            in_specs=[
                pl.BlockSpec((None, block_rows, Cin), lambda b, r: (b, r, 0)),
                pl.BlockSpec(fp["convw0"].shape, lambda b, r: (0, 0)),
                pl.BlockSpec(fp["convw"].shape, lambda b, r: (0, 0, 0)),
                pl.BlockSpec(fp["convb"].shape, lambda b, r: (0, 0, 0)),
                pl.BlockSpec(fp["tailw"].shape, lambda b, r: (0, 0)),
                pl.BlockSpec(fp["c2"].shape, lambda b, r: (0, 0)),
                pl.BlockSpec(fp["clsb"].shape, lambda b, r: (0, 0)),
                pl.BlockSpec(fp["wih"].shape, lambda b, r: (0, 0)),
                pl.BlockSpec(fp["whh"].shape, lambda b, r: (0, 0)),
                pl.BlockSpec(fp["lstmb"].shape, lambda b, r: (0, 0)),
                pl.BlockSpec(fp["detw"].shape, lambda b, r: (0, 0)),
                pl.BlockSpec(fp["detb"].shape, lambda b, r: (0, 0)),
            ],
            out_specs=pl.BlockSpec((None, 1, 128), lambda b, r: (b, 0, 0)),
            scratch_shapes=[pltpu.VMEM((L, CP), jnp.float32)],
        ),
        compiler_params=pltpu.CompilerParams(
            dimension_semantics=("parallel", "arbitrary"),  # batch across TCs on v7x
            vmem_limit_bytes=32 * 1024 * 1024,
        ),
    )(xr, fp["convw0"], fp["convw"], fp["convb"], fp["tailw"], fp["c2"],
      fp["clsb"], fp["wih"], fp["whh"], fp["lstmb"], fp["detw"], fp["detb"])

    logits = out[:, 0, :K]
    detector_out = out[:, 0, K:K + 1]
    return logits, detector_out


# ------------------------------ Param init / prep ----------------------------------

def init_params(key, c_in, channels, k, hid):
    """PyTorch-equivalent parameter layouts (weights transposed to (in, out))."""
    params = {}
    conv = []
    cin = c_in
    for cout in channels:
        key, k1, k2 = jax.random.split(key, 3)
        w = jax.random.normal(k1, (cin, cout), jnp.float32) / jnp.sqrt(float(cin))
        b = 0.01 * jax.random.normal(k2, (cout,), jnp.float32)
        conv.append((w, b))
        cin = cout
    params["conv"] = conv

    key, k1, k2 = jax.random.split(key, 3)
    params["cls_w"] = jax.random.normal(k1, (channels[-1], k), jnp.float32) / jnp.sqrt(float(channels[-1]))
    params["cls_b"] = 0.01 * jax.random.normal(k2, (k,), jnp.float32)

    cents = []
    for cout in channels:
        key, k1 = jax.random.split(key)
        cents.append(jax.random.normal(k1, (cout, k), jnp.float32))  # stored pre-transposed (C, K)
    params["centroids_t"] = cents

    # LSTM parameters (gate order i, f, g, o; b_ih + b_hh folded into a single bias).
    key, k1, k2, k3, k4, k5 = jax.random.split(key, 6)
    s = 1.0 / float(hid) ** 0.5
    params["lstm_wih"] = jax.random.uniform(k1, (k, 4 * hid), jnp.float32, -s, s)
    params["lstm_whh"] = jax.random.uniform(k2, (hid, 4 * hid), jnp.float32, -s, s)
    params["lstm_b"] = 2.0 * jax.random.uniform(k3, (1, 4 * hid), jnp.float32, -s, s)
    params["det_w"] = jax.random.uniform(k4, (1, hid), jnp.float32, -s, s)   # nn.Linear(H,1).weight
    params["det_b"] = jax.random.uniform(k5, (1, 1), jnp.float32, -s, s)
    return params, key


def prepare_fused_params(params):
    """One-time host-side prep: pad output channels to 128 lanes, cast conv weights to
    bf16, stack centroids + classifier into one tail weight, precompute centroid norms."""
    L = len(params["conv"])
    assert L >= 2

    w0, b0 = params["conv"][0]
    cin0, c0 = w0.shape
    convw0 = jnp.zeros((cin0, CP), jnp.float32).at[:, :c0].set(w0).astype(jnp.bfloat16)

    convw, convb = [], [jnp.zeros((CP,), jnp.float32).at[:c0].set(b0)]
    for (w, b) in params["conv"][1:]:
        cin, cout = w.shape
        convw.append(jnp.zeros((CP, CP), jnp.float32).at[:cin, :cout].set(w))
        convb.append(jnp.zeros((CP,), jnp.float32).at[:cout].set(b))
    convw = jnp.stack(convw).astype(jnp.bfloat16)            # (L-1, CP, CP) bf16
    convb = jnp.stack(convb).reshape(L, 1, CP)                # (L, 1, CP)  f32

    K = params["cls_w"].shape[1]
    cols, c2s = [], []
    for ct in params["centroids_t"]:                          # (C_l, K)
        c_l = ct.shape[0]
        cols.append(jnp.zeros((CP, K), jnp.float32).at[:c_l, :].set(ct))
        c2s.append(jnp.sum(ct * ct, axis=0))                  # (K,) precomputed
    cls_w = params["cls_w"]
    cols.append(jnp.zeros((CP, K), jnp.float32).at[:cls_w.shape[0], :].set(cls_w))
    tailw = jnp.concatenate(cols, axis=1)                     # (CP, (L+1)*K)
    c2 = jnp.stack(c2s, axis=0)                               # (L, K)

    return dict(convw0=convw0, convw=convw, convb=convb, tailw=tailw, c2=c2,
                clsb=params["cls_b"].reshape(1, K),
                wih=params["lstm_wih"], whh=params["lstm_whh"], lstmb=params["lstm_b"],
                detw=params["det_w"], detb=params["det_b"])


# ----------------------- Pure-JAX reference (same numerics policy) ---------------------

def reference_forward(x, fp):
    B, Cin, Himg, Wimg = x.shape
    HW = Himg * Wimg
    L = fp["convb"].shape[0]
    K = fp["clsb"].shape[1]
    H = fp["whh"].shape[0]

    cur = jnp.transpose(x, (0, 2, 3, 1)).reshape(B, HW, Cin).astype(jnp.bfloat16)
    pooled = []
    for l in range(L):
        w = fp["convw0"] if l == 0 else fp["convw"][l - 1]
        y = jnp.maximum(jnp.dot(cur, w, preferred_element_type=jnp.float32) + fp["convb"][l], 0.0)
        pooled.append(jnp.mean(y, axis=1))                    # (B, CP)
        cur = y.astype(jnp.bfloat16)

    logits = jnp.dot(pooled[-1], fp["tailw"][:, L * K:(L + 1) * K],
                     preferred_element_type=jnp.float32) + fp["clsb"]
    ds = []
    for l in range(L):
        p = pooled[l]
        xc = jnp.dot(p, fp["tailw"][:, l * K:(l + 1) * K], preferred_element_type=jnp.float32)
        x2 = jnp.sum(p * p, axis=-1, keepdims=True)
        ds.append(jnp.sqrt(jnp.maximum(x2 + fp["c2"][l] - 2.0 * xc, 0.0)))
    h = jnp.zeros((B, H), jnp.float32)
    c = jnp.zeros((B, H), jnp.float32)
    for t in range(L):
        gates = (jnp.dot(ds[t], fp["wih"], preferred_element_type=jnp.float32)
                 + jnp.dot(h, fp["whh"], preferred_element_type=jnp.float32) + fp["lstmb"])
        i_g = jax.nn.sigmoid(gates[:, 0:H])
        f_g = jax.nn.sigmoid(gates[:, H:2 * H])
        g_g = jnp.tanh(gates[:, 2 * H:3 * H])
        o_g = jax.nn.sigmoid(gates[:, 3 * H:4 * H])
        c = f_g * c + i_g * g_g
        h = o_g * jnp.tanh(c)
    det = jnp.sum(h * fp["detw"], axis=-1, keepdims=True) + fp["detb"]
    return logits, det


# --------------------------------- Main --------------------------------------

if __name__ == "__main__":
    key = jax.random.PRNGKey(0)

    B, C_IN, H_IMG, W_IMG = 2, 4, 16, 16   # NCHW input, like PyTorch
    CHANNELS = [8, 16, 32, 64]             # L = 4 intermediate feature layers
    K = 16                                 # identities / centroids (= LSTM input_size)
    HID = 32                               # detector LSTM hidden size (4H = 128 lanes)

    params, key = init_params(key, C_IN, CHANNELS, K, HID)
    fused_params = prepare_fused_params(params)

    key, sub = jax.random.split(key)
    x = jax.random.normal(sub, (B, C_IN, H_IMG, W_IMG), jnp.float32)

    # block_rows=128 at toy size so the pooled-accumulator / pl.when path is exercised;
    # at realistic spatial sizes the default (>=512) is used.
    fwd = jax.jit(functools.partial(threatened_model_forward, block_rows=128))
    logits, detector_out = fwd(x, fused_params)
    jax.block_until_ready((logits, detector_out))

    assert logits.shape == (B, K), logits.shape
    assert detector_out.shape == (B, 1), detector_out.shape
    assert bool(jnp.all(jnp.isfinite(logits))) and bool(jnp.all(jnp.isfinite(detector_out)))

    ref_logits, ref_det = reference_forward(x, fused_params)
    assert bool(jnp.allclose(logits, ref_logits, rtol=1e-1, atol=1e-1)), (
        float(jnp.max(jnp.abs(logits - ref_logits))))
    assert bool(jnp.allclose(detector_out, ref_det, rtol=1e-1, atol=1e-1)), (
        float(jnp.max(jnp.abs(detector_out - ref_det))))

    print("KERNEL_OK")
</pallas_src>

<mosaic_0001>
module attributes {stable_mosaic.version = 11 : i64} {
  func.func @fused_forward_kernel(%arg0: i32, %arg1: i32, %arg2: memref<1x128x4xbf16, #tpu.memory_space<vmem>>, %arg3: memref<4x128xbf16, #tpu.memory_space<vmem>>, %arg4: memref<3x128x128xbf16, #tpu.memory_space<vmem>>, %arg5: memref<4x1x128xf32, #tpu.memory_space<vmem>>, %arg6: memref<128x80xf32, #tpu.memory_space<vmem>>, %arg7: memref<4x16xf32, #tpu.memory_space<vmem>>, %arg8: memref<1x16xf32, #tpu.memory_space<vmem>>, %arg9: memref<16x128xf32, #tpu.memory_space<vmem>>, %arg10: memref<32x128xf32, #tpu.memory_space<vmem>>, %arg11: memref<1x128xf32, #tpu.memory_space<vmem>>, %arg12: memref<1x32xf32, #tpu.memory_space<vmem>>, %arg13: memref<1x1xf32, #tpu.memory_space<vmem>>, %arg14: memref<1x1x128xf32, #tpu.memory_space<vmem>>, %arg15: memref<4x128xf32, #tpu.memory_space<vmem>>) attributes {dimension_semantics = [#tpu.dimension_semantics<parallel>, #tpu.dimension_semantics<arbitrary>], iteration_bounds = array<i64: 2, 2>, scalar_prefetch = 0 : i64, scratch_operands = 1 : i64, tpu.core_type = #tpu.core_type<tc>, window_params = [{transform_indices = @transform_0, window_bounds = array<i64: 1, 128, 4>}, {pipeline_mode = #tpu.pipeline_mode<synchronous>, transform_indices = @transform_1, window_bounds = array<i64: 4, 128>}, {pipeline_mode = #tpu.pipeline_mode<synchronous>, transform_indices = @transform_2, window_bounds = array<i64: 3, 128, 128>}, {pipeline_mode = #tpu.pipeline_mode<synchronous>, transform_indices = @transform_3, window_bounds = array<i64: 4, 1, 128>}, {pipeline_mode = #tpu.pipeline_mode<synchronous>, transform_indices = @transform_4, window_bounds = array<i64: 128, 80>}, {pipeline_mode = #tpu.pipeline_mode<synchronous>, transform_indices = @transform_5, window_bounds = array<i64: 4, 16>}, {pipeline_mode = #tpu.pipeline_mode<synchronous>, transform_indices = @transform_6, window_bounds = array<i64: 1, 16>}, {pipeline_mode = #tpu.pipeline_mode<synchronous>, transform_indices = @transform_7, window_bounds = array<i64: 16, 128>}, {pipeline_mode = #tpu.pipeline_mode<synchronous>, transform_indices = @transform_8, window_bounds = array<i64: 32, 128>}, {pipeline_mode = #tpu.pipeline_mode<synchronous>, transform_indices = @transform_9, window_bounds = array<i64: 1, 128>}, {pipeline_mode = #tpu.pipeline_mode<synchronous>, transform_indices = @transform_10, window_bounds = array<i64: 1, 32>}, {pipeline_mode = #tpu.pipeline_mode<synchronous>, transform_indices = @transform_11, window_bounds = array<i64: 1, 1>}, {transform_indices = @transform_12, window_bounds = array<i64: 1, 1, 128>}]} {
    %c0_i32 = arith.constant 0 : i32
    %0 = arith.cmpi eq, %arg1, %c0_i32 : i32
    %1 = arith.extui %0 : i1 to i32
    %c0_i32_0 = arith.constant 0 : i32
    %2 = arith.cmpi ne, %1, %c0_i32_0 : i32
    scf.if %2 {
      %cst_39 = arith.constant 0.000000e+00 : f32
      %58 = vector.broadcast %cst_39 : f32 to vector<4x128xf32>
      %c0_40 = arith.constant 0 : index
      %c0_41 = arith.constant 0 : index
      %59 = vector.load %arg15[%c0_40, %c0_41] : memref<4x128xf32, #tpu.memory_space<vmem>>, vector<4x128xf32>
      tpu.vector_store %arg15[%c0_40, %c0_41], %58 {strides = array<i32>} : memref<4x128xf32, #tpu.memory_space<vmem>>, vector<4x128xf32>,
    } else {
    }
    %c0 = arith.constant 0 : index
    %c0_1 = arith.constant 0 : index
    %c0_2 = arith.constant 0 : index
    %3 = vector.load %arg2[%c0, %c0_1, %c0_2] : memref<1x128x4xbf16, #tpu.memory_space<vmem>>, vector<1x128x4xbf16>
    %4 = vector.shape_cast %3 : vector<1x128x4xbf16> to vector<128x4xbf16>
    %c0_3 = arith.constant 0 : index
    %c0_4 = arith.constant 0 : index
    %5 = vector.load %arg3[%c0_3, %c0_4] : memref<4x128xbf16, #tpu.memory_space<vmem>>, vector<4x128xbf16>
    %cst = arith.constant dense<0.000000e+00> : vector<128x128xf32>
    %6 = tpu.matmul %4, %5, %cst {dimension_numbers = #tpu.dot_dimension_numbers<[1], [0], [0], [1], [0, 0, 1, 1], [], []>} : vector<128x4xbf16>, vector<4x128xbf16>, vector<128x128xf32> -> vector<128x128xf32>
    %c0_5 = arith.constant 0 : index
    %c0_6 = arith.constant 0 : index
    %c0_7 = arith.constant 0 : index
    %7 = vector.load %arg5[%c0_5, %c0_6, %c0_7] : memref<4x1x128xf32, #tpu.memory_space<vmem>>, vector<1x1x128xf32>
    %8 = vector.shape_cast %7 : vector<1x1x128xf32> to vector<1x128xf32>
    %9 = vector.broadcast %8 : vector<1x128xf32> to vector<128x128xf32>
    %10 = arith.addf %6, %9 : vector<128x128xf32>
    %cst_8 = arith.constant 0.000000e+00 : f32
    %11 = vector.broadcast %cst_8 : f32 to vector<128x128xf32>
    %12 = arith.maximumf %10, %11 : vector<128x128xf32>
    %cst_9 = arith.constant dense<0.000000e+00> : vector<128xf32>
    %13 = vector.multi_reduction <add>, %12, %cst_9 [0] : vector<128x128xf32> to vector<128xf32>
    %14 = vector.shape_cast %13 : vector<128xf32> to vector<1x128xf32>
    %15 = arith.truncf %12 : vector<128x128xf32> to vector<128x128xbf16>
    %c0_10 = arith.constant 0 : index
    %c0_11 = arith.constant 0 : index
    %c0_12 = arith.constant 0 : index
    %16 = vector.load %arg4[%c0_10, %c0_11, %c0_12] : memref<3x128x128xbf16, #tpu.memory_space<vmem>>, vector<1x128x128xbf16>
    %17 = vector.shape_cast %16 : vector<1x128x128xbf16> to vector<128x128xbf16>
    %cst_13 = arith.constant dense<0.000000e+00> : vector<128x128xf32>
    %18 = tpu.matmul %15, %17, %cst_13 {dimension_numbers = #tpu.dot_dimension_numbers<[1], [0], [0], [1], [0, 0, 1, 1], [], []>} : vector<128x128xbf16>, vector<128x128xbf16>, vector<128x128xf32> -> vector<128x128xf32>
    %c1 = arith.constant 1 : index
    %c0_14 = arith.constant 0 : index
    %c0_15 = arith.constant 0 : index
    %19 = vector.load %arg5[%c1, %c0_14, %c0_15] : memref<4x1x128xf32, #tpu.memory_space<vmem>>, vector<1x1x128xf32>
    %20 = vector.shape_cast %19 : vector<1x1x128xf32> to vector<1x128xf32>
    %21 = vector.broadcast %20 : vector<1x128xf32> to vector<128x128xf32>
    %22 = arith.addf %18, %21 : vector<128x128xf32>
    %cst_16 = arith.constant 0.000000e+00 : f32
    %23 = vector.broadcast %cst_16 : f32 to vector<128x128xf32>
    %24 = arith.maximumf %22, %23 : vector<128x128xf32>
    %cst_17 = arith.constant dense<0.000000e+00> : vector<128xf32>
    %25 = vector.multi_reduction <add>, %24, %cst_17 [0] : vector<128x128xf32> to vector<128xf32>
    %26 = vector.shape_cast %25 : vector<128xf32> to vector<1x128xf32>
    %27 = arith.truncf %24 : vector<128x128xf32> to vector<128x128xbf16>
    %c1_18 = arith.constant 1 : index
    %c0_19 = arith.constant 0 : index
    %c0_20 = arith.constant 0 : index
    %28 = vector.load %arg4[%c1_18, %c0_19, %c0_20] : memref<3x128x128xbf16, #tpu.memory_space<vmem>>, vector<1x128x128xbf16>
    %29 = vector.shape_cast %28 : vector<1x128x128xbf16> to vector<128x128xbf16>
    %cst_21 = arith.constant dense<0.000000e+00> : vector<128x128xf32>
    %30 = tpu.matmul %27, %29, %cst_21 {dimension_numbers = #tpu.dot_dimension_numbers<[1], [0], [0], [1], [0, 0, 1, 1], [], []>} : vector<128x128xbf16>, vector<128x128xbf16>, vector<128x128xf32> -> vector<128x128xf32>
    %c2 = arith.constant 2 : index
    %c0_22 = arith.constant 0 : index
    %c0_23 = arith.constant 0 : index
    %31 = vector.load %arg5[%c2, %c0_22, %c0_23] : memref<4x1x128xf32, #tpu.memory_space<vmem>>, vector<1x1x128xf32>
    %32 = vector.shape_cast %31 : vector<1x1x128xf32> to vector<1x128xf32>
    %33 = vector.broadcast %32 : vector<1x128xf32> to vector<128x128xf32>
    %34 = arith.addf %30, %33 : vector<128x128xf32>
    %cst_24 = arith.constant 0.000000e+00 : f32
    %35 = vector.broadcast %cst_24 : f32 to vector<128x128xf32>
    %36 = arith.maximumf %34, %35 : vector<128x128xf32>
    %cst_25 = arith.constant dense<0.000000e+00> : vector<128xf32>
    %37 = vector.multi_reduction <add>, %36, %cst_25 [0] : vector<128x128xf32> to vector<128xf32>
    %38 = vector.shape_cast %37 : vector<128xf32> to vector<1x128xf32>
    %39 = arith.truncf %36 : vector<128x128xf32> to vector<128x128xbf16>
    %c2_26 = arith.constant 2 : index
    %c0_27 = arith.constant 0 : index
    %c0_28 = arith.constant 0 : index
    %40 = vector.load %arg4[%c2_26, %c0_27, %c0_28] : memref<3x128x128xbf16, #tpu.memory_space<vmem>>, vector<1x128x128xbf16>
    %41 = vector.shape_cast %40 : vector<1x128x128xbf16> to vector<128x128xbf16>
    %cst_29 = arith.constant dense<0.000000e+00> : vector<128x128xf32>
    %42 = tpu.matmul %39, %41, %cst_29 {dimension_numbers = #tpu.dot_dimension_numbers<[1], [0], [0], [1], [0, 0, 1, 1], [], []>} : vector<128x128xbf16>, vector<128x128xbf16>, vector<128x128xf32> -> vector<128x128xf32>
    %c3 = arith.constant 3 : index
    %c0_30 = arith.constant 0 : index
    %c0_31 = arith.constant 0 : index
    %43 = vector.load %arg5[%c3, %c0_30, %c0_31] : memref<4x1x128xf32, #tpu.memory_space<vmem>>, vector<1x1x128xf32>
    %44 = vector.shape_cast %43 : vector<1x1x128xf32> to vector<1x128xf32>
    %45 = vector.broadcast %44 : vector<1x128xf32> to vector<128x128xf32>
    %46 = arith.addf %42, %45 : vector<128x128xf32>
    %cst_32 = arith.constant 0.000000e+00 : f32
    %47 = vector.broadcast %cst_32 : f32 to vector<128x128xf32>
    %48 = arith.maximumf %46, %47 : vector<128x128xf32>
    %cst_33 = arith.constant dense<0.000000e+00> : vector<128xf32>
    %49 = vector.multi_reduction <add>, %48, %cst_33 [0] : vector<128x128xf32> to vector<128xf32>
    %50 = vector.shape_cast %49 : vector<128xf32> to vector<1x128xf32>
    %c0_34 = arith.constant 0 : index
    %c0_35 = arith.constant 0 : index
    %51 = vector.load %arg15[%c0_34, %c0_35] : memref<4x128xf32, #tpu.memory_space<vmem>>, vector<4x128xf32>
    %52 = tpu.concatenate %14, %26, %38, %50 in 0 : vector<1x128xf32>, vector<1x128xf32>, vector<1x128xf32>, vector<1x128xf32> -> vector<4x128xf32>
    %53 = arith.addf %51, %52 : vector<4x128xf32>
    %c0_36 = arith.constant 0 : index
    %c0_37 = arith.constant 0 : index
    %54 = vector.load %arg15[%c0_36, %c0_37] : memref<4x128xf32, #tpu.memory_space<vmem>>, vector<4x128xf32>
    tpu.vector_store %arg15[%c0_36, %c0_37], %53 {strides = array<i32>} : memref<4x128xf32, #tpu.memory_space<vmem>>, vector<4x128xf32>,
    %c1_i32 = arith.constant 1 : i32
    %55 = arith.cmpi eq, %arg1, %c1_i32 : i32
    %56 = arith.extui %55 : i1 to i32
    %c0_i32_38 = arith.constant 0 : i32
    %57 = arith.cmpi ne, %56, %c0_i32_38 : i32
    scf.if %57 {
      %c0_39 = arith.constant 0 : index
      %c0_40 = arith.constant 0 : index
      %58 = vector.load %arg15[%c0_39, %c0_40] : memref<4x128xf32, #tpu.memory_space<vmem>>, vector<4x128xf32>
      %cst_41 = arith.constant 3.906250e-03 : f32
      %59 = vector.broadcast %cst_41 : f32 to vector<4x128xf32>
      %60 = arith.mulf %58, %59 : vector<4x128xf32>
      %c0_42 = arith.constant 0 : index
      %c0_43 = arith.constant 0 : index
      %61 = vector.load %arg6[%c0_42, %c0_43] : memref<128x80xf32, #tpu.memory_space<vmem>>, vector<128x80xf32>
      %cst_44 = arith.constant dense<0.000000e+00> : vector<4x80xf32>
      %62 = tpu.matmul %60, %61, %cst_44 {dimension_numbers = #tpu.dot_dimension_numbers<[1], [0], [0], [1], [0, 0, 1, 1], [], []>} : vector<4x128xf32>, vector<128x80xf32>, vector<4x80xf32> -> vector<4x80xf32>
      %63 = vector.extract_strided_slice %62 {offsets = [3, 64], sizes = [1, 16], strides = [1, 1]} : vector<4x80xf32> to vector<1x16xf32>
      %c0_45 = arith.constant 0 : index
      %c0_46 = arith.constant 0 : index
      %64 = vector.load %arg8[%c0_45, %c0_46] : memref<1x16xf32, #tpu.memory_space<vmem>>, vector<1x16xf32>
      %65 = arith.addf %63, %64 : vector<1x16xf32>
      %66 = vector.extract_strided_slice %62 {offsets = [0, 0], sizes = [1, 16], strides = [1, 1]} : vector<4x80xf32> to vector<1x16xf32>
      %67 = vector.extract_strided_slice %62 {offsets = [1, 16], sizes = [1, 16], strides = [1, 1]} : vector<4x80xf32> to vector<1x16xf32>
      %68 = vector.extract_strided_slice %62 {offsets = [2, 32], sizes = [1, 16], strides = [1, 1]} : vector<4x80xf32> to vector<1x16xf32>
      %69 = vector.extract_strided_slice %62 {offsets = [3, 48], sizes = [1, 16], strides = [1, 1]} : vector<4x80xf32> to vector<1x16xf32>
      %70 = tpu.concatenate %66, %67, %68, %69 in 0 : vector<1x16xf32>, vector<1x16xf32>, vector<1x16xf32>, vector<1x16xf32> -> vector<4x16xf32>
      %71 = arith.mulf %60, %60 : vector<4x128xf32>
      %cst_47 = arith.constant dense<0.000000e+00> : vector<4xf32>
      %72 = vector.multi_reduction <add>, %71, %cst_47 [1] : vector<4x128xf32> to vector<4xf32>
      %73 = vector.shape_cast %72 : vector<4xf32> to vector<4x1xf32>
      %c0_48 = arith.constant 0 : index
      %c0_49 = arith.constant 0 : index
      %74 = vector.load %arg7[%c0_48, %c0_49] : memref<4x16xf32, #tpu.memory_space<vmem>>, vector<4x16xf32>
      %75 = vector.broadcast %73 : vector<4x1xf32> to vector<4x16xf32>
      %76 = arith.addf %75, %74 : vector<4x16xf32>
      %cst_50 = arith.constant 2.000000e+00 : f32
      %77 = vector.broadcast %cst_50 : f32 to vector<4x16xf32>
      %78 = arith.mulf %77, %70 : vector<4x16xf32>
      %79 = arith.subf %76, %78 : vector<4x16xf32>
      %cst_51 = arith.constant 0.000000e+00 : f32
      %80 = vector.broadcast %cst_51 : f32 to vector<4x16xf32>
      %81 = arith.maximumf %79, %80 : vector<4x16xf32>
      %82 = math.sqrt %81 : vector<4x16xf32>
      %c0_52 = arith.constant 0 : index
      %c0_53 = arith.constant 0 : index
      %83 = vector.load %arg9[%c0_52, %c0_53] : memref<16x128xf32, #tpu.memory_space<vmem>>, vector<16x128xf32>
      %cst_54 = arith.constant dense<0.000000e+00> : vector<4x128xf32>
      %84 = tpu.matmul %82, %83, %cst_54 {dimension_numbers = #tpu.dot_dimension_numbers<[1], [0], [0], [1], [0, 0, 1, 1], [], []>} : vector<4x16xf32>, vector<16x128xf32>, vector<4x128xf32> -> vector<4x128xf32>
      %c0_55 = arith.constant 0 : index
      %c0_56 = arith.constant 0 : index
      %85 = vector.load %arg11[%c0_55, %c0_56] : memref<1x128xf32, #tpu.memory_space<vmem>>, vector<1x128xf32>
      %86 = vector.broadcast %85 : vector<1x128xf32> to vector<4x128xf32>
      %87 = arith.addf %84, %86 : vector<4x128xf32>
      %cst_57 = arith.constant 0.000000e+00 : f32
      %88 = vector.broadcast %cst_57 : f32 to vector<1x32xf32>
      %cst_58 = arith.constant 0.000000e+00 : f32
      %89 = vector.broadcast %cst_58 : f32 to vector<1x32xf32>
      %90 = vector.extract_strided_slice %87 {offsets = [0, 0], sizes = [1, 128], strides = [1, 1]} : vector<4x128xf32> to vector<1x128xf32>
      %c0_59 = arith.constant 0 : index
      %c0_60 = arith.constant 0 : index
      %91 = vector.load %arg10[%c0_59, %c0_60] : memref<32x128xf32, #tpu.memory_space<vmem>>, vector<32x128xf32>
      %cst_61 = arith.constant dense<0.000000e+00> : vector<1x128xf32>
      %92 = tpu.matmul %88, %91, %cst_61 {dimension_numbers = #tpu.dot_dimension_numbers<[1], [0], [0], [1], [0, 0, 1, 1], [], []>} : vector<1x32xf32>, vector<32x128xf32>, vector<1x128xf32> -> vector<1x128xf32>
      %93 = arith.addf %90, %92 : vector<1x128xf32>
      %94 = vector.extract_strided_slice %93 {offsets = [0, 0], sizes = [1, 32], strides = [1, 1]} : vector<1x128xf32> to vector<1x32xf32>
      %cst_62 = arith.constant 0.000000e+00 : f32
      %95 = vector.broadcast %cst_62 : f32 to vector<1x32xf32>
      %96 = arith.subf %95, %94 : vector<1x32xf32>
      %97 = math.exp %96 : vector<1x32xf32>
      %cst_63 = arith.constant 1.000000e+00 : f32
      %98 = vector.broadcast %cst_63 : f32 to vector<1x32xf32>
      %99 = arith.addf %98, %97 : vector<1x32xf32>
      %100 = tpu.reciprocal %99 {approx = true} : vector<1x32xf32> -> vector<1x32xf32>
      %101 = vector.extract_strided_slice %93 {offsets = [0, 32], sizes = [1, 32], strides = [1, 1]} : vector<1x128xf32> to vector<1x32xf32>
      %cst_64 = arith.constant 0.000000e+00 : f32
      %102 = vector.broadcast %cst_64 : f32 to vector<1x32xf32>
      %103 = arith.subf %102, %101 : vector<1x32xf32>
      %104 = math.exp %103 : vector<1x32xf32>
      %cst_65 = arith.constant 1.000000e+00 : f32
      %105 = vector.broadcast %cst_65 : f32 to vector<1x32xf32>
      %106 = arith.addf %105, %104 : vector<1x32xf32>
      %107 = tpu.reciprocal %106 {approx = true} : vector<1x32xf32> -> vector<1x32xf32>
      %108 = vector.extract_strided_slice %93 {offsets = [0, 64], sizes = [1, 32], strides = [1, 1]} : vector<1x128xf32> to vector<1x32xf32>
      %109 = math.tanh %108 : vector<1x32xf32>
      %110 = vector.extract_strided_slice %93 {offsets = [0, 96], sizes = [1, 32], strides = [1, 1]} : vector<1x128xf32> to vector<1x32xf32>
      %cst_66 = arith.constant 0.000000e+00 : f32
      %111 = vector.broadcast %cst_66 : f32 to vector<1x32xf32>
      %112 = arith.subf %111, %110 : vector<1x32xf32>
      %113 = math.exp %112 : vector<1x32xf32>
      %cst_67 = arith.constant 1.000000e+00 : f32
      %114 = vector.broadcast %cst_67 : f32 to vector<1x32xf32>
      %115 = arith.addf %114, %113 : vector<1x32xf32>
      %116 = tpu.reciprocal %115 {approx = true} : vector<1x32xf32> -> vector<1x32xf32>
      %117 = arith.mulf %107, %89 : vector<1x32xf32>
      %118 = arith.mulf %100, %109 : vector<1x32xf32>
      %119 = arith.addf %117, %118 : vector<1x32xf32>
      %120 = math.tanh %119 : vector<1x32xf32>
      %121 = arith.mulf %116, %120 : vector<1x32xf32>
      %122 = vector.extract_strided_slice %87 {offsets = [1, 0], sizes = [1, 128], strides = [1, 1]} : vector<4x128xf32> to vector<1x128xf32>
      %c0_68 = arith.constant 0 : index
      %c0_69 = arith.constant 0 : index
      %123 = vector.load %arg10[%c0_68, %c0_69] : memref<32x128xf32, #tpu.memory_space<vmem>>, vector<32x128xf32>
      %cst_70 = arith.constant dense<0.000000e+00> : vector<1x128xf32>
      %124 = tpu.matmul %121, %123, %cst_70 {dimension_numbers = #tpu.dot_dimension_numbers<[1], [0], [0], [1], [0, 0, 1, 1], [], []>} : vector<1x32xf32>, vector<32x128xf32>, vector<1x128xf32> -> vector<1x128xf32>
      %125 = arith.addf %122, %124 : vector<1x128xf32>
      %126 = vector.extract_strided_slice %125 {offsets = [0, 0], sizes = [1, 32], strides = [1, 1]} : vector<1x128xf32> to vector<1x32xf32>
      %cst_71 = arith.constant 0.000000e+00 : f32
      %127 = vector.broadcast %cst_71 : f32 to vector<1x32xf32>
      %128 = arith.subf %127, %126 : vector<1x32xf32>
      %129 = math.exp %128 : vector<1x32xf32>
      %cst_72 = arith.constant 1.000000e+00 : f32
      %130 = vector.broadcast %cst_72 : f32 to vector<1x32xf32>
      %131 = arith.addf %130, %129 : vector<1x32xf32>
      %132 = tpu.reciprocal %131 {approx = true} : vector<1x32xf32> -> vector<1x32xf32>
      %133 = vector.extract_strided_slice %125 {offsets = [0, 32], sizes = [1, 32], strides = [1, 1]} : vector<1x128xf32> to vector<1x32xf32>
      %cst_73 = arith.constant 0.000000e+00 : f32
      %134 = vector.broadcast %cst_73 : f32 to vector<1x32xf32>
      %135 = arith.subf %134, %133 : vector<1x32xf32>
      %136 = math.exp %135 : vector<1x32xf32>
      %cst_74 = arith.constant 1.000000e+00 : f32
      %137 = vector.broadcast %cst_74 : f32 to vector<1x32xf32>
      %138 = arith.addf %137, %136 : vector<1x32xf32>
      %139 = tpu.reciprocal %138 {approx = true} : vector<1x32xf32> -> vector<1x32xf32>
      %140 = vector.extract_strided_slice %125 {offsets = [0, 64], sizes = [1, 32], strides = [1, 1]} : vector<1x128xf32> to vector<1x32xf32>
      %141 = math.tanh %140 : vector<1x32xf32>
      %142 = vector.extract_strided_slice %125 {offsets = [0, 96], sizes = [1, 32], strides = [1, 1]} : vector<1x128xf32> to vector<1x32xf32>
      %cst_75 = arith.constant 0.000000e+00 : f32
      %143 = vector.broadcast %cst_75 : f32 to vector<1x32xf32>
      %144 = arith.subf %143, %142 : vector<1x32xf32>
      %145 = math.exp %144 : vector<1x32xf32>
      %cst_76 = arith.constant 1.000000e+00 : f32
      %146 = vector.broadcast %cst_76 : f32 to vector<1x32xf32>
      %147 = arith.addf %146, %145 : vector<1x32xf32>
      %148 = tpu.reciprocal %147 {approx = true} : vector<1x32xf32> -> vector<1x32xf32>
      %149 = arith.mulf %139, %119 : vector<1x32xf32>
      %150 = arith.mulf %132, %141 : vector<1x32xf32>
      %151 = arith.addf %149, %150 : vector<1x32xf32>
      %152 = math.tanh %151 : vector<1x32xf32>
      %153 = arith.mulf %148, %152 : vector<1x32xf32>
      %154 = vector.extract_strided_slice %87 {offsets = [2, 0], sizes = [1, 128], strides = [1, 1]} : vector<4x128xf32> to vector<1x128xf32>
      %c0_77 = arith.constant 0 : index
      %c0_78 = arith.constant 0 : index
      %155 = vector.load %arg10[%c0_77, %c0_78] : memref<32x128xf32, #tpu.memory_space<vmem>>, vector<32x128xf32>
      %cst_79 = arith.constant dense<0.000000e+00> : vector<1x128xf32>
      %156 = tpu.matmul %153, %155, %cst_79 {dimension_numbers = #tpu.dot_dimension_numbers<[1], [0], [0], [1], [0, 0, 1, 1], [], []>} : vector<1x32xf32>, vector<32x128xf32>, vector<1x128xf32> -> vector<1x128xf32>
      %157 = arith.addf %154, %156 : vector<1x128xf32>
      %158 = vector.extract_strided_slice %157 {offsets = [0, 0], sizes = [1, 32], strides = [1, 1]} : vector<1x128xf32> to vector<1x32xf32>
      %cst_80 = arith.constant 0.000000e+00 : f32
      %159 = vector.broadcast %cst_80 : f32 to vector<1x32xf32>
      %160 = arith.subf %159, %158 : vector<1x32xf32>
      %161 = math.exp %160 : vector<1x32xf32>
      %cst_81 = arith.constant 1.000000e+00 : f32
      %162 = vector.broadcast %cst_81 : f32 to vector<1x32xf32>
      %163 = arith.addf %162, %161 : vector<1x32xf32>
      %164 = tpu.reciprocal %163 {approx = true} : vector<1x32xf32> -> vector<1x32xf32>
      %165 = vector.extract_strided_slice %157 {offsets = [0, 32], sizes = [1, 32], strides = [1, 1]} : vector<1x128xf32> to vector<1x32xf32>
      %cst_82 = arith.constant 0.000000e+00 : f32
      %166 = vector.broadcast %cst_82 : f32 to vector<1x32xf32>
      %167 = arith.subf %166, %165 : vector<1x32xf32>
      %168 = math.exp %167 : vector<1x32xf32>
      %cst_83 = arith.constant 1.000000e+00 : f32
      %169 = vector.broadcast %cst_83 : f32 to vector<1x32xf32>
      %170 = arith.addf %169, %168 : vector<1x32xf32>
      %171 = tpu.reciprocal %170 {approx = true} : vector<1x32xf32> -> vector<1x32xf32>
      %172 = vector.extract_strided_slice %157 {offsets = [0, 64], sizes = [1, 32], strides = [1, 1]} : vector<1x128xf32> to vector<1x32xf32>
      %173 = math.tanh %172 : vector<1x32xf32>
      %174 = vector.extract_strided_slice %157 {offsets = [0, 96], sizes = [1, 32], strides = [1, 1]} : vector<1x128xf32> to vector<1x32xf32>
      %cst_84 = arith.constant 0.000000e+00 : f32
      %175 = vector.broadcast %cst_84 : f32 to vector<1x32xf32>
      %176 = arith.subf %175, %174 : vector<1x32xf32>
      %177 = math.exp %176 : vector<1x32xf32>
      %cst_85 = arith.constant 1.000000e+00 : f32
      %178 = vector.broadcast %cst_85 : f32 to vector<1x32xf32>
      %179 = arith.addf %178, %177 : vector<1x32xf32>
      %180 = tpu.reciprocal %179 {approx = true} : vector<1x32xf32> -> vector<1x32xf32>
      %181 = arith.mulf %171, %151 : vector<1x32xf32>
      %182 = arith.mulf %164, %173 : vector<1x32xf32>
      %183 = arith.addf %181, %182 : vector<1x32xf32>
      %184 = math.tanh %183 : vector<1x32xf32>
      %185 = arith.mulf %180, %184 : vector<1x32xf32>
      %186 = vector.extract_strided_slice %87 {offsets = [3, 0], sizes = [1, 128], strides = [1, 1]} : vector<4x128xf32> to vector<1x128xf32>
      %c0_86 = arith.constant 0 : index
      %c0_87 = arith.constant 0 : index
      %187 = vector.load %arg10[%c0_86, %c0_87] : memref<32x128xf32, #tpu.memory_space<vmem>>, vector<32x128xf32>
      %cst_88 = arith.constant dense<0.000000e+00> : vector<1x128xf32>
      %188 = tpu.matmul %185, %187, %cst_88 {dimension_numbers = #tpu.dot_dimension_numbers<[1], [0], [0], [1], [0, 0, 1, 1], [], []>} : vector<1x32xf32>, vector<32x128xf32>, vector<1x128xf32> -> vector<1x128xf32>
      %189 = arith.addf %186, %188 : vector<1x128xf32>
      %190 = vector.extract_strided_slice %189 {offsets = [0, 0], sizes = [1, 32], strides = [1, 1]} : vector<1x128xf32> to vector<1x32xf32>
      %cst_89 = arith.constant 0.000000e+00 : f32
      %191 = vector.broadcast %cst_89 : f32 to vector<1x32xf32>
      %192 = arith.subf %191, %190 : vector<1x32xf32>
      %193 = math.exp %192 : vector<1x32xf32>
      %cst_90 = arith.constant 1.000000e+00 : f32
      %194 = vector.broadcast %cst_90 : f32 to vector<1x32xf32>
      %195 = arith.addf %194, %193 : vector<1x32xf32>
      %196 = tpu.reciprocal %195 {approx = true} : vector<1x32xf32> -> vector<1x32xf32>
      %197 = vector.extract_strided_slice %189 {offsets = [0, 32], sizes = [1, 32], strides = [1, 1]} : vector<1x128xf32> to vector<1x32xf32>
      %cst_91 = arith.constant 0.000000e+00 : f32
      %198 = vector.broadcast %cst_91 : f32 to vector<1x32xf32>
      %199 = arith.subf %198, %197 : vector<1x32xf32>
      %200 = math.exp %199 : vector<1x32xf32>
      %cst_92 = arith.constant 1.000000e+00 : f32
      %201 = vector.broadcast %cst_92 : f32 to vector<1x32xf32>
      %202 = arith.addf %201, %200 : vector<1x32xf32>
      %203 = tpu.reciprocal %202 {approx = true} : vector<1x32xf32> -> vector<1x32xf32>
      %204 = vector.extract_strided_slice %189 {offsets = [0, 64], sizes = [1, 32], strides = [1, 1]} : vector<1x128xf32> to vector<1x32xf32>
      %205 = math.tanh %204 : vector<1x32xf32>
      %206 = vector.extract_strided_slice %189 {offsets = [0, 96], sizes = [1, 32], strides = [1, 1]} : vector<1x128xf32> to vector<1x32xf32>
      %cst_93 = arith.constant 0.000000e+00 : f32
      %207 = vector.broadcast %cst_93 : f32 to vector<1x32xf32>
      %208 = arith.subf %207, %206 : vector<1x32xf32>
      %209 = math.exp %208 : vector<1x32xf32>
      %cst_94 = arith.constant 1.000000e+00 : f32
      %210 = vector.broadcast %cst_94 : f32 to vector<1x32xf32>
      %211 = arith.addf %210, %209 : vector<1x32xf32>
      %212 = tpu.reciprocal %211 {approx = true} : vector<1x32xf32> -> vector<1x32xf32>
      %213 = arith.mulf %203, %183 : vector<1x32xf32>
      %214 = arith.mulf %196, %205 : vector<1x32xf32>
      %215 = arith.addf %213, %214 : vector<1x32xf32>
      %216 = math.tanh %215 : vector<1x32xf32>
      %217 = arith.mulf %212, %216 : vector<1x32xf32>
      %c0_95 = arith.constant 0 : index
      %c0_96 = arith.constant 0 : index
      %218 = vector.load %arg12[%c0_95, %c0_96] : memref<1x32xf32, #tpu.memory_space<vmem>>, vector<1x32xf32>
      %219 = arith.mulf %217, %218 : vector<1x32xf32>
      %cst_97 = arith.constant dense<0.000000e+00> : vector<1xf32>
      %220 = vector.multi_reduction <add>, %219, %cst_97 [1] : vector<1x32xf32> to vector<1xf32>
      %221 = vector.shape_cast %220 : vector<1xf32> to vector<1x1xf32>
      %c0_98 = arith.constant 0 : index
      %c0_99 = arith.constant 0 : index
      %222 = vector.load %arg13[%c0_98, %c0_99] : memref<1x1xf32, #tpu.memory_space<vmem>>, vector<1x1xf32>
      %223 = arith.addf %221, %222 : vector<1x1xf32>
      %cst_100 = arith.constant 0.000000e+00 : f32
      %224 = vector.broadcast %cst_100 : f32 to vector<1x111xf32>
      %225 = tpu.concatenate %65, %223, %224 in 1 : vector<1x16xf32>, vector<1x1xf32>, vector<1x111xf32> -> vector<1x128xf32>
      %c0_101 = arith.constant 0 : index
      %c0_102 = arith.constant 0 : index
      %c0_103 = arith.constant 0 : index
      %226 = vector.load %arg14[%c0_101, %c0_102, %c0_103] : memref<1x1x128xf32, #tpu.memory_space<vmem>>, vector<1x1x128xf32>
      %227 = vector.shape_cast %226 : vector<1x1x128xf32> to vector<1x128xf32>
      %228 = vector.shape_cast %225 : vector<1x128xf32> to vector<1x1x128xf32>
      tpu.vector_store %arg14[%c0_101, %c0_102, %c0_103], %228 {strides = array<i32>} : memref<1x1x128xf32, #tpu.memory_space<vmem>>, vector<1x1x128xf32>,
    } else {
    }
    return
  }
  func.func @transform_0(%arg0: i32, %arg1: i32) -> (i32, i32, i32) {
    %c0_i32 = arith.constant 0 : i32
    %c0_i32_0 = arith.constant 0 : i32
    return %arg0, %arg1, %c0_i32 : i32, i32, i32
  }
  func.func @transform_1(%arg0: i32, %arg1: i32) -> (i32, i32) {
    %c0_i32 = arith.constant 0 : i32
    %c0_i32_0 = arith.constant 0 : i32
    %c0_i32_1 = arith.constant 0 : i32
    return %c0_i32, %c0_i32_0 : i32, i32
  }
  func.func @transform_2(%arg0: i32, %arg1: i32) -> (i32, i32, i32) {
    %c0_i32 = arith.constant 0 : i32
    %c0_i32_0 = arith.constant 0 : i32
    %c0_i32_1 = arith.constant 0 : i32
    %c0_i32_2 = arith.constant 0 : i32
    return %c0_i32, %c0_i32_0, %c0_i32_1 : i32, i32, i32
  }
  func.func @transform_3(%arg0: i32, %arg1: i32) -> (i32, i32, i32) {
    %c0_i32 = arith.constant 0 : i32
    %c0_i32_0 = arith.constant 0 : i32
    %c0_i32_1 = arith.constant 0 : i32
    %c0_i32_2 = arith.constant 0 : i32
    return %c0_i32, %c0_i32_0, %c0_i32_1 : i32, i32, i32
  }
  func.func @transform_4(%arg0: i32, %arg1: i32) -> (i32, i32) {
    %c0_i32 = arith.constant 0 : i32
    %c0_i32_0 = arith.constant 0 : i32
    %c0_i32_1 = arith.constant 0 : i32
    return %c0_i32, %c0_i32_0 : i32, i32
  }
  func.func @transform_5(%arg0: i32, %arg1: i32) -> (i32, i32) {
    %c0_i32 = arith.constant 0 : i32
    %c0_i32_0 = arith.constant 0 : i32
    %c0_i32_1 = arith.constant 0 : i32
    return %c0_i32, %c0_i32_0 : i32, i32
  }
  func.func @transform_6(%arg0: i32, %arg1: i32) -> (i32, i32) {
    %c0_i32 = arith.constant 0 : i32
    %c0_i32_0 = arith.constant 0 : i32
    %c0_i32_1 = arith.constant 0 : i32
    return %c0_i32, %c0_i32_0 : i32, i32
  }
  func.func @transform_7(%arg0: i32, %arg1: i32) -> (i32, i32) {
    %c0_i32 = arith.constant 0 : i32
    %c0_i32_0 = arith.constant 0 : i32
    %c0_i32_1 = arith.constant 0 : i32
    return %c0_i32, %c0_i32_0 : i32, i32
  }
  func.func @transform_8(%arg0: i32, %arg1: i32) -> (i32, i32) {
    %c0_i32 = arith.constant 0 : i32
    %c0_i32_0 = arith.constant 0 : i32
    %c0_i32_1 = arith.constant 0 : i32
    return %c0_i32, %c0_i32_0 : i32, i32
  }
  func.func @transform_9(%arg0: i32, %arg1: i32) -> (i32, i32) {
    %c0_i32 = arith.constant 0 : i32
    %c0_i32_0 = arith.constant 0 : i32
    %c0_i32_1 = arith.constant 0 : i32
    return %c0_i32, %c0_i32_0 : i32, i32
  }
  func.func @transform_10(%arg0: i32, %arg1: i32) -> (i32, i32) {
    %c0_i32 = arith.constant 0 : i32
    %c0_i32_0 = arith.constant 0 : i32
    %c0_i32_1 = arith.constant 0 : i32
    return %c0_i32, %c0_i32_0 : i32, i32
  }
  func.func @transform_11(%arg0: i32, %arg1: i32) -> (i32, i32) {
    %c0_i32 = arith.constant 0 : i32
    %c0_i32_0 = arith.constant 0 : i32
    %c0_i32_1 = arith.constant 0 : i32
    return %c0_i32, %c0_i32_0 : i32, i32
  }
  func.func @transform_12(%arg0: i32, %arg1: i32) -> (i32, i32, i32) {
    %c0_i32 = arith.constant 0 : i32
    %c0_i32_0 = arith.constant 0 : i32
    %c0_i32_1 = arith.constant 0 : i32
    return %arg0, %c0_i32, %c0_i32_0 : i32, i32, i32
  }
}

</mosaic_0001>

<llo_original>
// kernel: threatened_model_forward.1
$region0: #{threatened_model_forward.1}
  #allocation0 [shape = 'u32[]', space=smem, size = 0x4, offset = 0x4, fixed_abs, tag = 'smem constant byte address 0x4 - core index']
  #allocation1 [shape = 'u32[144,128]{1,0:T(1,128)}', space=vmem, size = 0x12000, scoped, tag = 'internal scratch']
  #allocation2 [shape = 'f32[4,128]{1,0:T(4,128)}', space=vmem, size = 0x800, scoped, tag = 'scratch operand']
  #allocation3 [shape = 'f32[1,1]{1,0:T(1,128)S(1)}', space=vmem, size = 0x200, scoped, tag = 'scoped memory for threatened_model_forward.1']
  %s0 = inlined_call_operand.vmem [shape: bf16[2,256,4], index: 0, kind: input, shape index: {}]
  %s1 = inlined_call_operand.vmem [shape: bf16[4,128], index: 1, kind: input, shape index: {}]
  %s2 = inlined_call_operand.vmem [shape: bf16[3,128,128], index: 2, kind: input, shape index: {}]
  %s3 = inlined_call_operand.vmem [shape: f32[4,1,128], index: 3, kind: input, shape index: {}]
  %s4 = inlined_call_operand.vmem [shape: f32[128,80], index: 4, kind: input, shape index: {}]
  %s5 = inlined_call_operand.vmem [shape: f32[4,16], index: 5, kind: input, shape index: {}]
  %s6 = inlined_call_operand.vmem [shape: f32[1,16], index: 6, kind: input, shape index: {}]
  %s7 = inlined_call_operand.vmem [shape: f32[16,128], index: 7, kind: input, shape index: {}]
  %s8 = inlined_call_operand.vmem [shape: f32[32,128], index: 8, kind: input, shape index: {}]
  %s9 = inlined_call_operand.vmem [shape: f32[1,128], index: 9, kind: input, shape index: {}]
  %s10 = inlined_call_operand.vmem [shape: f32[1,32], index: 10, kind: input, shape index: {}]
  %s11 = inlined_call_operand.<no memory space> [shape: f32[1,1], index: 11, kind: input, shape index: {}]
  %s12 = inlined_call_operand.vmem [shape: f32[2,1,128], index: 12, kind: output, shape index: {}]
  %s13 = sld [smem:[#allocation0]]
  $region89: #{threatened_model_forward.1} parent=0
    _
  %s15 = ssub.s32 1, %s13
  %s16 = scalar_select 0, %s15, %s13
  %v17 = vstv %s11
  %18 = vst [vmem:[#allocation3] sm:$0x1] %v17
  loop: start=0, step=1, limit=6
  $region2: #{threatened_model_forward.1} parent=0 // loop_pre_header
    _
  $region3: #{threatened_model_forward.1} parent=0 // loop_header
    %s20 = sphi 0, %s24
    %p21 = scmp.ge.s32.totalorder %s20, 6
    %s27 = sphi 0, %s39
    %s28 = sphi 0, %s35
    %s29 = sphi 0, %s27
    %s30 = sphi 0, %s28
    %s31 = sphi 0, %s29
    %s32 = sphi 0, %s30
    %s44 = sphi 0, %s46
    %s47 = sphi 0, %s44
    %s48 = sphi 0, %s47
    %s64 = sphi 0, %s48
    %s68 = sphi 0, %s68
    %s70 = sphi 0, %s68
    %s71 = sphi 0, %s70
    %s85 = sphi 0, %s71
    %s89 = sphi 0, %s89
    %s91 = sphi 0, %s89
    %s92 = sphi 0, %s91
    %s106 = sphi 0, %s92
    %s110 = sphi 0, %s110
    %s112 = sphi 0, %s110
    %s113 = sphi 0, %s112
    %s127 = sphi 0, %s113
    %s131 = sphi 0, %s131
    %s133 = sphi 0, %s131
    %s134 = sphi 0, %s133
    %s148 = sphi 0, %s134
    %s152 = sphi 0, %s152
    %s154 = sphi 0, %s152
    %s155 = sphi 0, %s154
    %s169 = sphi 0, %s155
    %s173 = sphi 0, %s173
    %s175 = sphi 0, %s173
    %s176 = sphi 0, %s175
    %s190 = sphi 0, %s176
    %s194 = sphi 0, %s194
    %s196 = sphi 0, %s194
    %s197 = sphi 0, %s196
    %s211 = sphi 0, %s197
    %s215 = sphi 0, %s215
    %s217 = sphi 0, %s215
    %s218 = sphi 0, %s217
    %s232 = sphi 0, %s218
    %s236 = sphi 0, %s236
    %s238 = sphi 0, %s236
    %s239 = sphi 0, %s238
    %s253 = sphi 0, %s239
    %s257 = sphi 0, %s257
    %s259 = sphi 0, %s257
    %s260 = sphi 0, %s259
    %s274 = sphi 0, %s260
    %s278 = sphi 0, %s278
    %s280 = sphi 0, %s278
    %s281 = sphi 0, %s280
    %s295 = sphi 0, %s281
    %s301 = sphi 0, %s303
    %s304 = sphi 0, %s301
    %s305 = sphi 0, %s304
    %s321 = sphi 0, %s305
  $region4: #{threatened_model_forward.1} parent=0 // loop_header_branch
    %23 = sbr.rel (%p21) target = $region8
  $region5: #{threatened_model_forward.1} parent=0 // loop_body
    %s25 = ssub.s32 %s20, 1
    %s26 = ssub.s32 %s20, 2
    %s33 = sadd.s32 1, %s28
    %p34 = scmp.ge.s32.totalorder %s33, 2
    %s35 = scalar_select %p34, 0, %s33
    %s36 = sadd.s32 1, %s27
    %s37 = scalar_select %p34, %s36, %s27
    %p38 = scmp.ge.s32.totalorder %s37, 2
    %s39 = scalar_select %p38, 0, %s37
    %s40 = ssub.s32 %s27, %s39
    %s41 = ssub.s32 %s28, %s35
    %s42 = sor.u32 %s40, %s41
    %p43 = scmp.eq.s32.totalorder %s42, 0
    %s45 = sadd.s32 %s44, 1
    %s46 = scalar_select %p43, %s44, %s45
    %p49 = pneg %p43
    %p50 = scmp.eq.s32.totalorder %s20, 3
    %p51 = por %p49, %p50
    %p52 = scmp.ne.s32.totalorder %s44, %s47
    %p53 = scmp.eq.s32.totalorder %s20, 0
    %p54 = por %p52, %p53
    %p55 = scmp.ne.s32.totalorder %s44, %s47
    %p56 = scmp.eq.s32.totalorder %s25, 3
    %p57 = por %p55, %p56
    %p58 = scmp.ne.s32.totalorder %s47, %s48
    %p59 = scmp.eq.s32.totalorder %s25, 0
    %p60 = por %p58, %p59
    %p61 = scmp.ne.s32.totalorder %s47, %s48
    %p62 = scmp.eq.s32.totalorder %s26, 3
    %p63 = por %p61, %p62
    %p65 = scmp.ne.s32.totalorder %s48, %s64
    %p66 = scmp.eq.s32.totalorder %s26, 0
    %p67 = por %p65, %p66
    %s69 = sadd.s32 %s68, 1
    %p72 = scmp.eq.s32.totalorder %s20, 3
    %p73 = scmp.ne.s32.totalorder %s68, %s70
    %p74 = scmp.eq.s32.totalorder %s20, 0
    %p75 = por %p73, %p74
    %p76 = scmp.ne.s32.totalorder %s68, %s70
    %p77 = scmp.eq.s32.totalorder %s25, 3
    %p78 = por %p76, %p77
    %p79 = scmp.ne.s32.totalorder %s70, %s71
    %p80 = scmp.eq.s32.totalorder %s25, 0
    %p81 = por %p79, %p80
    %p82 = scmp.ne.s32.totalorder %s70, %s71
    %p83 = scmp.eq.s32.totalorder %s26, 3
    %p84 = por %p82, %p83
    %p86 = scmp.ne.s32.totalorder %s71, %s85
    %p87 = scmp.eq.s32.totalorder %s26, 0
    %p88 = por %p86, %p87
    %s90 = sadd.s32 %s89, 1
    %p93 = scmp.eq.s32.totalorder %s20, 3
    %p94 = scmp.ne.s32.totalorder %s89, %s91
    %p95 = scmp.eq.s32.totalorder %s20, 0
    %p96 = por %p94, %p95
    %p97 = scmp.ne.s32.totalorder %s89, %s91
    %p98 = scmp.eq.s32.totalorder %s25, 3
    %p99 = por %p97, %p98
    %p100 = scmp.ne.s32.totalorder %s91, %s92
    %p101 = scmp.eq.s32.totalorder %s25, 0
    %p102 = por %p100, %p101
    %p103 = scmp.ne.s32.totalorder %s91, %s92
    %p104 = scmp.eq.s32.totalorder %s26, 3
    %p105 = por %p103, %p104
    %p107 = scmp.ne.s32.totalorder %s92, %s106
    %p108 = scmp.eq.s32.totalorder %s26, 0
    %p109 = por %p107, %p108
    %s111 = sadd.s32 %s110, 1
    %p114 = scmp.eq.s32.totalorder %s20, 3
    %p115 = scmp.ne.s32.totalorder %s110, %s112
    %p116 = scmp.eq.s32.totalorder %s20, 0
    %p117 = por %p115, %p116
    %p118 = scmp.ne.s32.totalorder %s110, %s112
    %p119 = scmp.eq.s32.totalorder %s25, 3
    %p120 = por %p118, %p119
    %p121 = scmp.ne.s32.totalorder %s112, %s113
    %p122 = scmp.eq.s32.totalorder %s25, 0
    %p123 = por %p121, %p122
    %p124 = scmp.ne.s32.totalorder %s112, %s113
    %p125 = scmp.eq.s32.totalorder %s26, 3
    %p126 = por %p124, %p125
    %p128 = scmp.ne.s32.totalorder %s113, %s127
    %p129 = scmp.eq.s32.totalorder %s26, 0
    %p130 = por %p128, %p129
    %s132 = sadd.s32 %s131, 1
    %p135 = scmp.eq.s32.totalorder %s20, 3
    %p136 = scmp.ne.s32.totalorder %s131, %s133
    %p137 = scmp.eq.s32.totalorder %s20, 0
    %p138 = por %p136, %p137
    %p139 = scmp.ne.s32.totalorder %s131, %s133
    %p140 = scmp.eq.s32.totalorder %s25, 3
    %p141 = por %p139, %p140
    %p142 = scmp.ne.s32.totalorder %s133, %s134
    %p143 = scmp.eq.s32.totalorder %s25, 0
    %p144 = por %p142, %p143
    %p145 = scmp.ne.s32.totalorder %s133, %s134
    %p146 = scmp.eq.s32.totalorder %s26, 3
    %p147 = por %p145, %p146
    %p149 = scmp.ne.s32.totalorder %s134, %s148
    %p150 = scmp.eq.s32.totalorder %s26, 0
    %p151 = por %p149, %p150
    %s153 = sadd.s32 %s152, 1
    %p156 = scmp.eq.s32.totalorder %s20, 3
    %p157 = scmp.ne.s32.totalorder %s152, %s154
    %p158 = scmp.eq.s32.totalorder %s20, 0
    %p159 = por %p157, %p158
    %p160 = scmp.ne.s32.totalorder %s152, %s154
    %p161 = scmp.eq.s32.totalorder %s25, 3
    %p162 = por %p160, %p161
    %p163 = scmp.ne.s32.totalorder %s154, %s155
    %p164 = scmp.eq.s32.totalorder %s25, 0
    %p165 = por %p163, %p164
    %p166 = scmp.ne.s32.totalorder %s154, %s155
    %p167 = scmp.eq.s32.totalorder %s26, 3
    %p168 = por %p166, %p167
    %p170 = scmp.ne.s32.totalorder %s155, %s169
    %p171 = scmp.eq.s32.totalorder %s26, 0
    %p172 = por %p170, %p171
    %s174 = sadd.s32 %s173, 1
    %p177 = scmp.eq.s32.totalorder %s20, 3
    %p178 = scmp.ne.s32.totalorder %s173, %s175
    %p179 = scmp.eq.s32.totalorder %s20, 0
    %p180 = por %p178, %p179
    %p181 = scmp.ne.s32.totalorder %s173, %s175
    %p182 = scmp.eq.s32.totalorder %s25, 3
    %p183 = por %p181, %p182
    %p184 = scmp.ne.s32.totalorder %s175, %s176
    %p185 = scmp.eq.s32.totalorder %s25, 0
    %p186 = por %p184, %p185
    %p187 = scmp.ne.s32.totalorder %s175, %s176
    %p188 = scmp.eq.s32.totalorder %s26, 3
    %p189 = por %p187, %p188
    %p191 = scmp.ne.s32.totalorder %s176, %s190
    %p192 = scmp.eq.s32.totalorder %s26, 0
    %p193 = por %p191, %p192
    %s195 = sadd.s32 %s194, 1
    %p198 = scmp.eq.s32.totalorder %s20, 3
    %p199 = scmp.ne.s32.totalorder %s194, %s196
    %p200 = scmp.eq.s32.totalorder %s20, 0
    %p201 = por %p199, %p200
    %p202 = scmp.ne.s32.totalorder %s194, %s196
    %p203 = scmp.eq.s32.totalorder %s25, 3
    %p204 = por %p202, %p203
    %p205 = scmp.ne.s32.totalorder %s196, %s197
    %p206 = scmp.eq.s32.totalorder %s25, 0
    %p207 = por %p205, %p206
    %p208 = scmp.ne.s32.totalorder %s196, %s197
    %p209 = scmp.eq.s32.totalorder %s26, 3
    %p210 = por %p208, %p209
    %p212 = scmp.ne.s32.totalorder %s197, %s211
    %p213 = scmp.eq.s32.totalorder %s26, 0
    %p214 = por %p212, %p213
    %s216 = sadd.s32 %s215, 1
    %p219 = scmp.eq.s32.totalorder %s20, 3
    %p220 = scmp.ne.s32.totalorder %s215, %s217
    %p221 = scmp.eq.s32.totalorder %s20, 0
    %p222 = por %p220, %p221
    %p223 = scmp.ne.s32.totalorder %s215, %s217
    %p224 = scmp.eq.s32.totalorder %s25, 3
    %p225 = por %p223, %p224
    %p226 = scmp.ne.s32.totalorder %s217, %s218
    %p227 = scmp.eq.s32.totalorder %s25, 0
    %p228 = por %p226, %p227
    %p229 = scmp.ne.s32.totalorder %s217, %s218
    %p230 = scmp.eq.s32.totalorder %s26, 3
    %p231 = por %p229, %p230
    %p233 = scmp.ne.s32.totalorder %s218, %s232
    %p234 = scmp.eq.s32.totalorder %s26, 0
    %p235 = por %p233, %p234
    %s237 = sadd.s32 %s236, 1
    %p240 = scmp.eq.s32.totalorder %s20, 3
    %p241 = scmp.ne.s32.totalorder %s236, %s238
    %p242 = scmp.eq.s32.totalorder %s20, 0
    %p243 = por %p241, %p242
    %p244 = scmp.ne.s32.totalorder %s236, %s238
    %p245 = scmp.eq.s32.totalorder %s25, 3
    %p246 = por %p244, %p245
    %p247 = scmp.ne.s32.totalorder %s238, %s239
    %p248 = scmp.eq.s32.totalorder %s25, 0
    %p249 = por %p247, %p248
    %p250 = scmp.ne.s32.totalorder %s238, %s239
    %p251 = scmp.eq.s32.totalorder %s26, 3
    %p252 = por %p250, %p251
    %p254 = scmp.ne.s32.totalorder %s239, %s253
    %p255 = scmp.eq.s32.totalorder %s26, 0
    %p256 = por %p254, %p255
    %s258 = sadd.s32 %s257, 1
    %p261 = scmp.eq.s32.totalorder %s20, 3
    %p262 = scmp.ne.s32.totalorder %s257, %s259
    %p263 = scmp.eq.s32.totalorder %s20, 0
    %p264 = por %p262, %p263
    %p265 = scmp.ne.s32.totalorder %s257, %s259
    %p266 = scmp.eq.s32.totalorder %s25, 3
    %p267 = por %p265, %p266
    %p268 = scmp.ne.s32.totalorder %s259, %s260
    %p269 = scmp.eq.s32.totalorder %s25, 0
    %p270 = por %p268, %p269
    %p271 = scmp.ne.s32.totalorder %s259, %s260
    %p272 = scmp.eq.s32.totalorder %s26, 3
    %p273 = por %p271, %p272
    %p275 = scmp.ne.s32.totalorder %s260, %s274
    %p276 = scmp.eq.s32.totalorder %s26, 0
    %p277 = por %p275, %p276
    %s279 = sadd.s32 %s278, 1
    %p282 = scmp.eq.s32.totalorder %s20, 3
    %p283 = scmp.ne.s32.totalorder %s278, %s280
    %p284 = scmp.eq.s32.totalorder %s20, 0
    %p285 = por %p283, %p284
    %p286 = scmp.ne.s32.totalorder %s278, %s280
    %p287 = scmp.eq.s32.totalorder %s25, 3
    %p288 = por %p286, %p287
    %p289 = scmp.ne.s32.totalorder %s280, %s281
    %p290 = scmp.eq.s32.totalorder %s25, 0
    %p291 = por %p289, %p290
    %p292 = scmp.ne.s32.totalorder %s280, %s281
    %p293 = scmp.eq.s32.totalorder %s26, 3
    %p294 = por %p292, %p293
    %p296 = scmp.ne.s32.totalorder %s281, %s295
    %p297 = scmp.eq.s32.totalorder %s26, 0
    %p298 = por %p296, %p297
    %s299 = ssub.s32 %s27, %s39
    %p300 = scmp.eq.s32.totalorder %s299, 0
    %s302 = sadd.s32 %s301, 1
    %s303 = scalar_select %p300, %s301, %s302
    %p306 = pneg %p300
    %p307 = scmp.eq.s32.totalorder %s20, 3
    %p308 = por %p306, %p307
    %p309 = scmp.ne.s32.totalorder %s301, %s304
    %p310 = scmp.eq.s32.totalorder %s20, 0
    %p311 = por %p309, %p310
    %p312 = scmp.ne.s32.totalorder %s301, %s304
    %p313 = scmp.eq.s32.totalorder %s25, 3
    %p314 = por %p312, %p313
    %p315 = scmp.ne.s32.totalorder %s304, %s305
    %p316 = scmp.eq.s32.totalorder %s25, 0
    %p317 = por %p315, %p316
    %p318 = scmp.ne.s32.totalorder %s304, %s305
    %p319 = scmp.eq.s32.totalorder %s26, 3
    %p320 = por %p318, %p319
    %p322 = scmp.ne.s32.totalorder %s305, %s321
    %p323 = scmp.eq.s32.totalorder %s26, 0
    %p324 = por %p322, %p323
    %p325 = scmp.le.s32.totalorder 1, %s20
    %p326 = scmp.lt.s32.totalorder %s20, 5
    %p327 = pnand %p325, %p326
    %p328 = pneg %p327
    // Predicated region
    $region9: #{threatened_model_forward.1} parent=5 // pred_check
      _
    $region10: #{threatened_model_forward.1} parent=5 // pred_check_branch
      %330 = sbr.rel (%p327) target = $region12
    $region11: #{threatened_model_forward.1} parent=5 // pred_region
      %s331 = ssub.s32 %s20, 1
      // Predicated region
      $region13: #{threatened_model_forward.1} parent=11 // pred_check
        %p332 = pneg %p81
      $region14: #{threatened_model_forward.1} parent=11 // pred_check_branch
        %334 = sbr.rel (%p332) target = $region16
      $region15: #{threatened_model_forward.1} parent=11 // pred_region
        _
      $region16: #{threatened_model_forward.1} parent=11 // pred_fallthru
        _
      // Predicated region
      $region17: #{threatened_model_forward.1} parent=11 // pred_check
        %p335 = pneg %p102
      $region18: #{threatened_model_forward.1} parent=11 // pred_check_branch
        %337 = sbr.rel (%p335) target = $region20
      $region19: #{threatened_model_forward.1} parent=11 // pred_region
        _
      $region20: #{threatened_model_forward.1} parent=11 // pred_fallthru
        _
      // Predicated region
      $region21: #{threatened_model_forward.1} parent=11 // pred_check
        %p338 = pneg %p123
      $region22: #{threatened_model_forward.1} parent=11 // pred_check_branch
        %340 = sbr.rel (%p338) target = $region24
      $region23: #{threatened_model_forward.1} parent=11 // pred_region
        _
      $region24: #{threatened_model_forward.1} parent=11 // pred_fallthru
        _
      // Predicated region
      $region25: #{threatened_model_forward.1} parent=11 // pred_check
        %p341 = pneg %p144
      $region26: #{threatened_model_forward.1} parent=11 // pred_check_branch
        %343 = sbr.rel (%p341) target = $region28
      $region27: #{threatened_model_forward.1} parent=11 // pred_region
        _
      $region28: #{threatened_model_forward.1} parent=11 // pred_fallthru
        _
      // Predicated region
      $region29: #{threatened_model_forward.1} parent=11 // pred_check
        %p344 = pneg %p165
      $region30: #{threatened_model_forward.1} parent=11 // pred_check_branch
        %346 = sbr.rel (%p344) target = $region32
      $region31: #{threatened_model_forward.1} parent=11 // pred_region
        _
      $region32: #{threatened_model_forward.1} parent=11 // pred_fallthru
        _
      // Predicated region
      $region33: #{threatened_model_forward.1} parent=11 // pred_check
        %p347 = pneg %p186
      $region34: #{threatened_model_forward.1} parent=11 // pred_check_branch
        %349 = sbr.rel (%p347) target = $region36
      $region35: #{threatened_model_forward.1} parent=11 // pred_region
        _
      $region36: #{threatened_model_forward.1} parent=11 // pred_fallthru
        _
      // Predicated region
      $region37: #{threatened_model_forward.1} parent=11 // pred_check
        %p350 = pneg %p207
      $region38: #{threatened_model_forward.1} parent=11 // pred_check_branch
        %352 = sbr.rel (%p350) target = $region40
      $region39: #{threatened_model_forward.1} parent=11 // pred_region
        _
      $region40: #{threatened_model_forward.1} parent=11 // pred_fallthru
        _
      // Predicated region
      $region41: #{threatened_model_forward.1} parent=11 // pred_check
        %p353 = pneg %p228
      $region42: #{threatened_model_forward.1} parent=11 // pred_check_branch
        %355 = sbr.rel (%p353) target = $region44
      $region43: #{threatened_model_forward.1} parent=11 // pred_region
        _
      $region44: #{threatened_model_forward.1} parent=11 // pred_fallthru
        _
      // Predicated region
      $region45: #{threatened_model_forward.1} parent=11 // pred_check
        %p356 = pneg %p249
      $region46: #{threatened_model_forward.1} parent=11 // pred_check_branch
        %358 = sbr.rel (%p356) target = $region48
      $region47: #{threatened_model_forward.1} parent=11 // pred_region
        _
      $region48: #{threatened_model_forward.1} parent=11 // pred_fallthru
        _
      // Predicated region
      $region49: #{threatened_model_forward.1} parent=11 // pred_check
        %p359 = pneg %p270
      $region50: #{threatened_model_forward.1} parent=11 // pred_check_branch
        %361 = sbr.rel (%p359) target = $region52
      $region51: #{threatened_model_forward.1} parent=11 // pred_region
        _
      $region52: #{threatened_model_forward.1} parent=11 // pred_fallthru
        _
      // Predicated region
      $region53: #{threatened_model_forward.1} parent=11 // pred_check
        %p362 = pneg %p291
      $region54: #{threatened_model_forward.1} parent=11 // pred_check_branch
        %364 = sbr.rel (%p362) target = $region56
      $region55: #{threatened_model_forward.1} parent=11 // pred_region
        _
      $region56: #{threatened_model_forward.1} parent=11 // pred_fallthru
        _
    $region12: #{threatened_model_forward.1} parent=5 // pred_fallthru
      _
    %p365 = scmp.lt.s32.totalorder %s20, 4
    // Predicated region
    $region57: #{threatened_model_forward.1} parent=5 // pred_check
      %p366 = pneg %p365
    $region58: #{threatened_model_forward.1} parent=5 // pred_check_branch
      %368 = sbr.rel (%p366) target = $region60
    $region59: #{threatened_model_forward.1} parent=5 // pred_region
      // Predicated region
      $region61: #{threatened_model_forward.1} parent=59 // pred_check
        %p369 = pneg %p54
      $region62: #{threatened_model_forward.1} parent=59 // pred_check_branch
        %371 = sbr.rel (%p369) target = $region64
      $region63: #{threatened_model_forward.1} parent=59 // pred_region
        %s372 = smul.u32 16, %s28
        %p373 = scmp.lt.s32.totalorder %s27, 1
        %s374 = scalar_select %p373, %s27, 1
        %p375 = scmp.lt.s32.totalorder %s372, 31
        %s376 = scalar_select %p375, %s372, 31
        %s377 = smul.addr %s374, 32
        %s378 = sadd.s32 %s376, %s377
        %s379 = smul.addr %s378, 4
        %s380 = scalar_lea.vmem %s0, %s379
        %s381 = smul.u32 16, %s28
      $region64: #{threatened_model_forward.1} parent=59 // pred_fallthru
        _
    $region60: #{threatened_model_forward.1} parent=5 // pred_fallthru
      _
    %p382 = scmp.le.s32.totalorder 1, %s20
    %p383 = scmp.lt.s32.totalorder %s20, 5
    %p384 = pnand %p382, %p383
    %p385 = pneg %p384
    // Predicated region
    $region65: #{threatened_model_forward.1} parent=5 // pred_check
      _
    $region66: #{threatened_model_forward.1} parent=5 // pred_check_branch
      %387 = sbr.rel (%p384) target = $region68
    $region67: #{threatened_model_forward.1} parent=5 // pred_region
      %s388 = ssub.s32 %s20, 1
      %s389 = smul.u32 16, %s30
      %p390 = scmp.lt.s32.totalorder %s29, 1
      %s391 = scalar_select %p390, %s29, 1
      %p392 = scmp.lt.s32.totalorder %s389, 31
      %s393 = scalar_select %p392, %s389, 31
      %s394 = smul.addr %s391, 32
      %s395 = sadd.s32 %s393, %s394
      %s396 = smul.addr %s395, 4
      %s397 = scalar_lea.vmem %s0, %s396
      %p398 = pneg %p60
      %p399 = pneg %p57
      %p400 = pneg %p81
      %p401 = pneg %p78
      %p402 = pneg %p102
      %p403 = pneg %p99
      %p404 = pneg %p123
      %p405 = pneg %p120
      %p406 = pneg %p144
      %p407 = pneg %p141
      %p408 = pneg %p165
      %p409 = pneg %p162
      %p410 = pneg %p186
      %p411 = pneg %p183
      %p412 = pneg %p207
      %p413 = pneg %p204
      %p414 = pneg %p228
      %p415 = pneg %p225
      %p416 = pneg %p249
      %p417 = pneg %p246
      %p418 = pneg %p270
      %p419 = pneg %p267
      %p420 = pneg %p291
      %p421 = pneg %p288
      %p422 = pneg %p317
      %p423 = pneg %p314
      %p424 = scmp.lt.s32.totalorder %s29, 1
      %s425 = scalar_select %p424, %s29, 1
      %s426 = scalar_lea.vmem %s12, %s425
      %s427 = smul.u32 16, %s30
      %p428 = scmp.lt.s32.totalorder %s29, 1
      %s429 = scalar_select %p428, %s29, 1
      %p430 = scmp.lt.s32.totalorder %s427, 31
      %s431 = scalar_select %p430, %s427, 31
      %s432 = smul.addr %s429, 32
      %s433 = sadd.s32 %s431, %s432
      %s434 = smul.addr %s433, 4
      %s435 = scalar_lea.vmem %s0, %s434
      %s436 = smul.u32 16, %s30
      %p437 = scmp.lt.s32.totalorder %s29, 1
      %s438 = scalar_select %p437, %s29, 1
      %s439 = scalar_lea.vmem %s12, %s438
      %p441 = scmp.eq.s32.totalorder %s30, 0
      // Predicated region
      $region69: #{threatened_model_forward.1} parent=67 // pred_check
        %p442 = pneg %p441
      $region70: #{threatened_model_forward.1} parent=67 // pred_check_branch
        %444 = sbr.rel (%p442) target = $region72
      $region71: #{threatened_model_forward.1} parent=67 // pred_region
        %445 = vst [vmem:[#allocation2] sm:$0xf] 0.0
      $region72: #{threatened_model_forward.1} parent=67 // pred_fallthru
        _
      %v446 = vld [vmem:[%s435] sm:$0xf]
      %v447 = vld [vmem:[%s435 + $0x4] sm:$0xf]
      %v448 = vld [vmem:[%s435 + $0x8] sm:$0xf]
      %v449 = vld [vmem:[%s435 + $0xc] sm:$0xf]
      %v450 = vld [vmem:[%s435 + $0x10] sm:$0xf]
      %v451 = vld [vmem:[%s435 + $0x14] sm:$0xf]
      %v452 = vld [vmem:[%s435 + $0x18] sm:$0xf]
      %v453 = vld [vmem:[%s435 + $0x1c] sm:$0xf]
      %v454 = vld [vmem:[%s435 + $0x20] sm:$0xf]
      %v455 = vld [vmem:[%s435 + $0x24] sm:$0xf]
      %v456 = vld [vmem:[%s435 + $0x28] sm:$0xf]
      %v457 = vld [vmem:[%s435 + $0x2c] sm:$0xf]
      %v458 = vld [vmem:[%s435 + $0x30] sm:$0xf]
      %v459 = vld [vmem:[%s435 + $0x34] sm:$0xf]
      %v460 = vld [vmem:[%s435 + $0x38] sm:$0xf]
      %v461 = vld [vmem:[%s435 + $0x3c] sm:$0xf]
      %v462 = vld [vmem:[%s1] sm:$0x3]
      %v463 = vld [vmem:[%s3] sm:$0x1]
      %v465 = vlaneseq
      %v466 = vshrl.u32 %v465, 7
      %v467 = vsub.s32 0, %v466
      %v468 = vrot.slane %v463, %v467
      %v486 = vunpack.c.l.b16 %v446
      %v487 = vunpack.c.l.b16 %v447
      %v488 = vunpack.c.l.b16 %v448
      %v489 = vunpack.c.l.b16 %v449
      %v490 = vunpack.c.l.b16 %v450
      %v491 = vunpack.c.l.b16 %v451
      %v492 = vunpack.c.l.b16 %v452
      %v493 = vunpack.c.l.b16 %v453
      %v494 = vunpack.c.l.b16 %v454
      %v495 = vunpack.c.l.b16 %v455
      %v496 = vunpack.c.l.b16 %v456
      %v497 = vunpack.c.l.b16 %v457
      %v498 = vunpack.c.l.b16 %v458
      %v499 = vunpack.c.l.b16 %v459
      %v500 = vunpack.c.l.b16 %v460
      %v501 = vunpack.c.l.b16 %v461
      %v502 = vpack.c.b16 %v487, %v486
      %v503 = vpack.c.b16 %v489, %v488
      %v504 = vpack.c.b16 %v491, %v490
      %v505 = vpack.c.b16 %v493, %v492
      %v506 = vpack.c.b16 %v495, %v494
      %v507 = vpack.c.b16 %v497, %v496
      %v508 = vpack.c.b16 %v499, %v498
      %v509 = vpack.c.b16 %v501, %v500
      %vm510 = vcmask 31744
      %v512 = vsel %vm510, %v502, 0
      %v515 = vsel %vm510, %v503, 0
      %v518 = vsel %vm510, %v504, 0
      %v521 = vsel %vm510, %v505, 0
      %v524 = vsel %vm510, %v506, 0
      %v527 = vsel %vm510, %v507, 0
      %v530 = vsel %vm510, %v508, 0
      %v533 = vsel %vm510, %v509, 0
      %vm535 = vcmask 1041408
      %v537 = vsel %vm535, %v462, 0
      %539 = vmatprep.subr.bf16.mxu0 0
      %540 = vmatpush1.bf16.msra.mxu0 0
      %541 = vmatprep.subr.bf16.mxu0 0
      %542 = vmatpush1.bf16.msra.mxu0 0
      %543 = vmatprep.subr.bf16.mxu0 0
      %544 = vmatpush1.bf16.msra.mxu0 0
      %545 = vmatprep.subr.bf16.mxu0 0
      %546 = vmatpush1.bf16.msra.mxu0 0
      %547 = vmatprep.subr.bf16.mxu0 0
      %548 = vmatpush1.bf16.msra.mxu0 0
      %549 = vmatprep.subr.bf16.mxu0 0
      %550 = vmatpush1.bf16.msra.mxu0 0
      %551 = vmatprep.subr.bf16.mxu0 0
      %552 = vmatpush1.bf16.msra.mxu0 0
      %553 = vmatprep.subr.bf16.mxu0 0
      %554 = vmatpush1.bf16.msra.mxu0 %v537
      %555 = vmatprep.subr.bf16.mxu0 0
      %556 = vmatpush2.bf16.msra.mxu0 0
      %557 = vmatprep.subr.bf16.mxu0 0
      %558 = vmatpush2.bf16.msra.mxu0 0
      %559 = vmatprep.subr.bf16.mxu0 0
      %560 = vmatpush2.bf16.msra.mxu0 0
      %561 = vmatprep.subr.bf16.mxu0 0
      %562 = vmatpush2.bf16.msra.mxu0 0
      %563 = vmatprep.subr.bf16.mxu0 0
      %564 = vmatpush2.bf16.msra.mxu0 0
      %565 = vmatprep.subr.bf16.mxu0 0
      %566 = vmatpush2.bf16.msra.mxu0 0
      %567 = vmatprep.subr.bf16.mxu0 0
      %568 = vmatpush2.bf16.msra.mxu0 0
      %569 = vmatprep.subr.bf16.mxu0 0
      %570 = vmatpush2.bf16.msra.mxu0 0
      %571 = vmatprep.mubr.bf16.mxu0 0
      %572 = vmatmul.mubr.bf16.gmra.mxu0 %v512
      %v573 = vpop.f32.mrf.mxu0
      %v574 = vadd.f32 %v468, %v573
      %v575 = vpop.f32.mrf.mxu0
      %v576 = vpop.f32.mrf.mxu0
      %v577 = vadd.f32 %v468, %v576
      %v578 = vpop.f32.mrf.mxu0
      %579 = vmatprep.mubr.bf16.mxu0 0
      %580 = vmatmul.mubr.bf16.gmra.mxu0 %v515
      %v581 = vpop.f32.mrf.mxu0
      %v582 = vadd.f32 %v468, %v581
      %v583 = vpop.f32.mrf.mxu0
      %v584 = vpop.f32.mrf.mxu0
      %v585 = vadd.f32 %v468, %v584
      %v586 = vpop.f32.mrf.mxu0
      %587 = vmatprep.mubr.bf16.mxu0 0
      %588 = vmatmul.mubr.bf16.gmra.mxu0 %v518
      %v589 = vpop.f32.mrf.mxu0
      %v590 = vadd.f32 %v468, %v589
      %v591 = vpop.f32.mrf.mxu0
      %v592 = vpop.f32.mrf.mxu0
      %v593 = vadd.f32 %v468, %v592
      %v594 = vpop.f32.mrf.mxu0
      %595 = vmatprep.mubr.bf16.mxu0 0
      %596 = vmatmul.mubr.bf16.gmra.mxu0 %v521
      %v597 = vpop.f32.mrf.mxu0
      %v598 = vadd.f32 %v468, %v597
      %v599 = vpop.f32.mrf.mxu0
      %v600 = vpop.f32.mrf.mxu0
      %v601 = vadd.f32 %v468, %v600
      %v602 = vpop.f32.mrf.mxu0
      %603 = vmatprep.mubr.bf16.mxu0 0
      %604 = vmatmul.mubr.bf16.gmra.mxu0 %v524
      %v605 = vpop.f32.mrf.mxu0
      %v606 = vadd.f32 %v468, %v605
      %v607 = vpop.f32.mrf.mxu0
      %v608 = vpop.f32.mrf.mxu0
      %v609 = vadd.f32 %v468, %v608
      %v610 = vpop.f32.mrf.mxu0
      %611 = vmatprep.mubr.bf16.mxu0 0
      %612 = vmatmul.mubr.bf16.gmra.mxu0 %v527
      %v613 = vpop.f32.mrf.mxu0
      %v614 = vadd.f32 %v468, %v613
      %v615 = vpop.f32.mrf.mxu0
      %v616 = vpop.f32.mrf.mxu0
      %v617 = vadd.f32 %v468, %v616
      %v618 = vpop.f32.mrf.mxu0
      %619 = vmatprep.mubr.bf16.mxu0 0
      %620 = vmatmul.mubr.bf16.gmra.mxu0 %v530
      %v621 = vpop.f32.mrf.mxu0
      %v622 = vadd.f32 %v468, %v621
      %v623 = vpop.f32.mrf.mxu0
      %v624 = vpop.f32.mrf.mxu0
      %v625 = vadd.f32 %v468, %v624
      %v626 = vpop.f32.mrf.mxu0
      %627 = vmatprep.mubr.bf16.mxu0 0
      %628 = vmatmul.mubr.bf16.gmra.mxu0 %v533
      %v629 = vpop.f32.mrf.mxu0
      %v630 = vadd.f32 %v468, %v629
      %v631 = vpop.f32.mrf.mxu0
      %v632 = vpop.f32.mrf.mxu0
      %v633 = vadd.f32 %v468, %v632
      %v634 = vpop.f32.mrf.mxu0
      %635 = vdwg.mxu0
      %v636 = vmax.f32 %v574, 0.0
      %v637 = vmax.f32 %v577, 0.0
      %v638 = vmax.f32 %v582, 0.0
      %v639 = vmax.f32 %v585, 0.0
      %v640 = vmax.f32 %v590, 0.0
      %v641 = vmax.f32 %v593, 0.0
      %v642 = vmax.f32 %v598, 0.0
      %v643 = vmax.f32 %v601, 0.0
      %v644 = vmax.f32 %v606, 0.0
      %v645 = vmax.f32 %v609, 0.0
      %v646 = vmax.f32 %v614, 0.0
      %v647 = vmax.f32 %v617, 0.0
      %v648 = vmax.f32 %v622, 0.0
      %v649 = vmax.f32 %v625, 0.0
      %v650 = vmax.f32 %v630, 0.0
      %v651 = vmax.f32 %v633, 0.0
      %v652 = vadd.f32 %v636, %v637
      %v653 = vadd.f32 %v652, %v638
      %v654 = vadd.f32 %v653, %v639
      %v655 = vadd.f32 %v654, %v640
      %v656 = vadd.f32 %v655, %v641
      %v657 = vadd.f32 %v656, %v642
      %v658 = vadd.f32 %v657, %v643
      %v659 = vadd.f32 %v658, %v644
      %v660 = vadd.f32 %v659, %v645
      %v661 = vadd.f32 %v660, %v646
      %v662 = vadd.f32 %v661, %v647
      %v663 = vadd.f32 %v662, %v648
      %v664 = vadd.f32 %v663, %v649
      %v665 = vadd.f32 %v664, %v650
      %v666 = vadd.f32 %v665, %v651
      %v667 = vrot.slane %v666, 4
      %v668 = vadd.f32 %v666, %v667
      %v669 = vrot.slane %v668, 2
      %v670 = vadd.f32 %v668, %v669
      %v671 = vrot.slane %v670, 1
      %v672 = vadd.f32 %v670, %v671
      %v673 = vpack.c.bf16 %v637, %v636
      %v674 = vpack.c.bf16 %v639, %v638
      %v675 = vpack.c.bf16 %v641, %v640
      %v676 = vpack.c.bf16 %v643, %v642
      %v677 = vpack.c.bf16 %v645, %v644
      %v678 = vpack.c.bf16 %v647, %v646
      %v679 = vpack.c.bf16 %v649, %v648
      %v680 = vpack.c.bf16 %v651, %v650
      %v681 = vld [vmem:[%s2] sm:$0xf]
      %v682 = vld [vmem:[%s2 + $0x4] sm:$0xf]
      %v683 = vld [vmem:[%s2 + $0x8] sm:$0xf]
      %v684 = vld [vmem:[%s2 + $0xc] sm:$0xf]
      %v685 = vld [vmem:[%s2 + $0x10] sm:$0xf]
      %v686 = vld [vmem:[%s2 + $0x14] sm:$0xf]
      %v687 = vld [vmem:[%s2 + $0x18] sm:$0xf]
      %v688 = vld [vmem:[%s2 + $0x1c] sm:$0xf]
      %v689 = vld [vmem:[%s2 + $0x20] sm:$0xf]
      %v690 = vld [vmem:[%s2 + $0x24] sm:$0xf]
      %v691 = vld [vmem:[%s2 + $0x28] sm:$0xf]
      %v692 = vld [vmem:[%s2 + $0x2c] sm:$0xf]
      %v693 = vld [vmem:[%s2 + $0x30] sm:$0xf]
      %v694 = vld [vmem:[%s2 + $0x34] sm:$0xf]
      %v695 = vld [vmem:[%s2 + $0x38] sm:$0xf]
      %v696 = vld [vmem:[%s2 + $0x3c] sm:$0xf]
      %s697 = scalar_lea.vmem %s3, 1
      %v698 = vld [vmem:[%s697] sm:$0x1]
      %v700 = vlaneseq
      %v701 = vshrl.u32 %v700, 7
      %v702 = vsub.s32 0, %v701
      %v703 = vrot.slane %v698, %v702
      %v721 = vunpack.c.l.b16 %v681
      %v722 = vunpack.c.l.b16 %v682
      %v723 = vunpack.c.l.b16 %v683
      %v724 = vunpack.c.l.b16 %v684
      %v725 = vunpack.c.l.b16 %v685
      %v726 = vunpack.c.l.b16 %v686
      %v727 = vunpack.c.l.b16 %v687
      %v728 = vunpack.c.l.b16 %v688
      %v729 = vunpack.c.l.b16 %v689
      %v730 = vunpack.c.l.b16 %v690
      %v731 = vunpack.c.l.b16 %v691
      %v732 = vunpack.c.l.b16 %v692
      %v733 = vunpack.c.l.b16 %v693
      %v734 = vunpack.c.l.b16 %v694
      %v735 = vunpack.c.l.b16 %v695
      %v736 = vunpack.c.l.b16 %v696
      %v737 = vpack.c.b16 %v722, %v721
      %v738 = vpack.c.b16 %v724, %v723
      %v739 = vpack.c.b16 %v726, %v725
      %v740 = vpack.c.b16 %v728, %v727
      %v741 = vpack.c.b16 %v730, %v729
      %v742 = vpack.c.b16 %v732, %v731
      %v743 = vpack.c.b16 %v734, %v733
      %v744 = vpack.c.b16 %v736, %v735
      %753 = vmatprep.subr.bf16.mxu0 0
      %754 = vmatpush1.bf16.msra.mxu0 %v744
      %755 = vmatprep.subr.bf16.mxu0 0
      %756 = vmatpush1.bf16.msra.mxu0 %v743
      %757 = vmatprep.subr.bf16.mxu0 0
      %758 = vmatpush1.bf16.msra.mxu0 %v742
      %759 = vmatprep.subr.bf16.mxu0 0
      %760 = vmatpush1.bf16.msra.mxu0 %v741
      %761 = vmatprep.subr.bf16.mxu0 0
      %762 = vmatpush1.bf16.msra.mxu0 %v740
      %763 = vmatprep.subr.bf16.mxu0 0
      %764 = vmatpush1.bf16.msra.mxu0 %v739
      %765 = vmatprep.subr.bf16.mxu0 0
      %766 = vmatpush1.bf16.msra.mxu0 %v738
      %767 = vmatprep.subr.bf16.mxu0 0
      %768 = vmatpush1.bf16.msra.mxu0 %v737
      %769 = vmatprep.subr.bf16.mxu0 0
      %770 = vmatpush2.bf16.msra.mxu0 0
      %771 = vmatprep.subr.bf16.mxu0 0
      %772 = vmatpush2.bf16.msra.mxu0 0
      %773 = vmatprep.subr.bf16.mxu0 0
      %774 = vmatpush2.bf16.msra.mxu0 0
      %775 = vmatprep.subr.bf16.mxu0 0
      %776 = vmatpush2.bf16.msra.mxu0 0
      %777 = vmatprep.subr.bf16.mxu0 0
      %778 = vmatpush2.bf16.msra.mxu0 0
      %779 = vmatprep.subr.bf16.mxu0 0
      %780 = vmatpush2.bf16.msra.mxu0 0
      %781 = vmatprep.subr.bf16.mxu0 0
      %782 = vmatpush2.bf16.msra.mxu0 0
      %783 = vmatprep.subr.bf16.mxu0 0
      %784 = vmatpush2.bf16.msra.mxu0 0
      %785 = vmatprep.mubr.bf16.mxu0 0
      %786 = vmatmul.mubr.bf16.gmra.mxu0 %v673
      %v787 = vpop.f32.mrf.mxu0
      %v788 = vadd.f32 %v703, %v787
      %v789 = vpop.f32.mrf.mxu0
      %v790 = vpop.f32.mrf.mxu0
      %v791 = vadd.f32 %v703, %v790
      %v792 = vpop.f32.mrf.mxu0
      %793 = vmatprep.mubr.bf16.mxu0 0
      %794 = vmatmul.mubr.bf16.gmra.mxu0 %v674
      %v795 = vpop.f32.mrf.mxu0
      %v796 = vadd.f32 %v703, %v795
      %v797 = vpop.f32.mrf.mxu0
      %v798 = vpop.f32.mrf.mxu0
      %v799 = vadd.f32 %v703, %v798
      %v800 = vpop.f32.mrf.mxu0
      %801 = vmatprep.mubr.bf16.mxu0 0
      %802 = vmatmul.mubr.bf16.gmra.mxu0 %v675
      %v803 = vpop.f32.mrf.mxu0
      %v804 = vadd.f32 %v703, %v803
      %v805 = vpop.f32.mrf.mxu0
      %v806 = vpop.f32.mrf.mxu0
      %v807 = vadd.f32 %v703, %v806
      %v808 = vpop.f32.mrf.mxu0
      %809 = vmatprep.mubr.bf16.mxu0 0
      %810 = vmatmul.mubr.bf16.gmra.mxu0 %v676
      %v811 = vpop.f32.mrf.mxu0
      %v812 = vadd.f32 %v703, %v811
      %v813 = vpop.f32.mrf.mxu0
      %v814 = vpop.f32.mrf.mxu0
      %v815 = vadd.f32 %v703, %v814
      %v816 = vpop.f32.mrf.mxu0
      %817 = vmatprep.mubr.bf16.mxu0 0
      %818 = vmatmul.mubr.bf16.gmra.mxu0 %v677
      %v819 = vpop.f32.mrf.mxu0
      %v820 = vadd.f32 %v703, %v819
      %v821 = vpop.f32.mrf.mxu0
      %v822 = vpop.f32.mrf.mxu0
      %v823 = vadd.f32 %v703, %v822
      %v824 = vpop.f32.mrf.mxu0
      %825 = vmatprep.mubr.bf16.mxu0 0
      %826 = vmatmul.mubr.bf16.gmra.mxu0 %v678
      %v827 = vpop.f32.mrf.mxu0
      %v828 = vadd.f32 %v703, %v827
      %v829 = vpop.f32.mrf.mxu0
      %v830 = vpop.f32.mrf.mxu0
      %v831 = vadd.f32 %v703, %v830
      %v832 = vpop.f32.mrf.mxu0
      %833 = vmatprep.mubr.bf16.mxu0 0
      %834 = vmatmul.mubr.bf16.gmra.mxu0 %v679
      %v835 = vpop.f32.mrf.mxu0
      %v836 = vadd.f32 %v703, %v835
      %v837 = vpop.f32.mrf.mxu0
      %v838 = vpop.f32.mrf.mxu0
      %v839 = vadd.f32 %v703, %v838
      %v840 = vpop.f32.mrf.mxu0
      %841 = vmatprep.mubr.bf16.mxu0 0
      %842 = vmatmul.mubr.bf16.gmra.mxu0 %v680
      %v843 = vpop.f32.mrf.mxu0
      %v844 = vadd.f32 %v703, %v843
      %v845 = vpop.f32.mrf.mxu0
      %v846 = vpop.f32.mrf.mxu0
      %v847 = vadd.f32 %v703, %v846
      %v848 = vpop.f32.mrf.mxu0
      %849 = vdwg.mxu0
      %v850 = vmax.f32 %v788, 0.0
      %v851 = vmax.f32 %v791, 0.0
      %v852 = vmax.f32 %v796, 0.0
      %v853 = vmax.f32 %v799, 0.0
      %v854 = vmax.f32 %v804, 0.0
      %v855 = vmax.f32 %v807, 0.0
      %v856 = vmax.f32 %v812, 0.0
      %v857 = vmax.f32 %v815, 0.0
      %v858 = vmax.f32 %v820, 0.0
      %v859 = vmax.f32 %v823, 0.0
      %v860 = vmax.f32 %v828, 0.0
      %v861 = vmax.f32 %v831, 0.0
      %v862 = vmax.f32 %v836, 0.0
      %v863 = vmax.f32 %v839, 0.0
      %v864 = vmax.f32 %v844, 0.0
      %v865 = vmax.f32 %v847, 0.0
      %v866 = vadd.f32 %v850, %v851
      %v867 = vadd.f32 %v866, %v852
      %v868 = vadd.f32 %v867, %v853
      %v869 = vadd.f32 %v868, %v854
      %v870 = vadd.f32 %v869, %v855
      %v871 = vadd.f32 %v870, %v856
      %v872 = vadd.f32 %v871, %v857
      %v873 = vadd.f32 %v872, %v858
      %v874 = vadd.f32 %v873, %v859
      %v875 = vadd.f32 %v874, %v860
      %v876 = vadd.f32 %v875, %v861
      %v877 = vadd.f32 %v876, %v862
      %v878 = vadd.f32 %v877, %v863
      %v879 = vadd.f32 %v878, %v864
      %v880 = vadd.f32 %v879, %v865
      %v881 = vrot.slane %v880, 4
      %v882 = vadd.f32 %v880, %v881
      %v883 = vrot.slane %v882, 2
      %v884 = vadd.f32 %v882, %v883
      %v885 = vrot.slane %v884, 1
      %v886 = vadd.f32 %v884, %v885
      %v887 = vpack.c.bf16 %v851, %v850
      %v888 = vpack.c.bf16 %v853, %v852
      %v889 = vpack.c.bf16 %v855, %v854
      %v890 = vpack.c.bf16 %v857, %v856
      %v891 = vpack.c.bf16 %v859, %v858
      %v892 = vpack.c.bf16 %v861, %v860
      %v893 = vpack.c.bf16 %v863, %v862
      %v894 = vpack.c.bf16 %v865, %v864
      %s895 = scalar_lea.vmem %s2, 64
      %v896 = vld [vmem:[%s895] sm:$0xf]
      %v897 = vld [vmem:[%s895 + $0x4] sm:$0xf]
      %v898 = vld [vmem:[%s895 + $0x8] sm:$0xf]
      %v899 = vld [vmem:[%s895 + $0xc] sm:$0xf]
      %v900 = vld [vmem:[%s895 + $0x10] sm:$0xf]
      %v901 = vld [vmem:[%s895 + $0x14] sm:$0xf]
      %v902 = vld [vmem:[%s895 + $0x18] sm:$0xf]
      %v903 = vld [vmem:[%s895 + $0x1c] sm:$0xf]
      %v904 = vld [vmem:[%s895 + $0x20] sm:$0xf]
      %v905 = vld [vmem:[%s895 + $0x24] sm:$0xf]
      %v906 = vld [vmem:[%s895 + $0x28] sm:$0xf]
      %v907 = vld [vmem:[%s895 + $0x2c] sm:$0xf]
      %v908 = vld [vmem:[%s895 + $0x30] sm:$0xf]
      %v909 = vld [vmem:[%s895 + $0x34] sm:$0xf]
      %v910 = vld [vmem:[%s895 + $0x38] sm:$0xf]
      %v911 = vld [vmem:[%s895 + $0x3c] sm:$0xf]
      %s912 = scalar_lea.vmem %s3, 2
      %v913 = vld [vmem:[%s912] sm:$0x1]
      %v915 = vlaneseq
      %v916 = vshrl.u32 %v915, 7
      %v917 = vsub.s32 0, %v916
      %v918 = vrot.slane %v913, %v917
      %v936 = vunpack.c.l.b16 %v896
      %v937 = vunpack.c.l.b16 %v897
      %v938 = vunpack.c.l.b16 %v898
      %v939 = vunpack.c.l.b16 %v899
      %v940 = vunpack.c.l.b16 %v900
      %v941 = vunpack.c.l.b16 %v901
      %v942 = vunpack.c.l.b16 %v902
      %v943 = vunpack.c.l.b16 %v903
      %v944 = vunpack.c.l.b16 %v904
      %v945 = vunpack.c.l.b16 %v905
      %v946 = vunpack.c.l.b16 %v906
      %v947 = vunpack.c.l.b16 %v907
      %v948 = vunpack.c.l.b16 %v908
      %v949 = vunpack.c.l.b16 %v909
      %v950 = vunpack.c.l.b16 %v910
      %v951 = vunpack.c.l.b16 %v911
      %v952 = vpack.c.b16 %v937, %v936
      %v953 = vpack.c.b16 %v939, %v938
      %v954 = vpack.c.b16 %v941, %v940
      %v955 = vpack.c.b16 %v943, %v942
      %v956 = vpack.c.b16 %v945, %v944
      %v957 = vpack.c.b16 %v947, %v946
      %v958 = vpack.c.b16 %v949, %v948
      %v959 = vpack.c.b16 %v951, %v950
      %968 = vmatprep.subr.bf16.mxu0 0
      %969 = vmatpush1.bf16.msra.mxu0 %v959
      %970 = vmatprep.subr.bf16.mxu0 0
      %971 = vmatpush1.bf16.msra.mxu0 %v958
      %972 = vmatprep.subr.bf16.mxu0 0
      %973 = vmatpush1.bf16.msra.mxu0 %v957
      %974 = vmatprep.subr.bf16.mxu0 0
      %975 = vmatpush1.bf16.msra.mxu0 %v956
      %976 = vmatprep.subr.bf16.mxu0 0
      %977 = vmatpush1.bf16.msra.mxu0 %v955
      %978 = vmatprep.subr.bf16.mxu0 0
      %979 = vmatpush1.bf16.msra.mxu0 %v954
      %980 = vmatprep.subr.bf16.mxu0 0
      %981 = vmatpush1.bf16.msra.mxu0 %v953
      %982 = vmatprep.subr.bf16.mxu0 0
      %983 = vmatpush1.bf16.msra.mxu0 %v952
      %984 = vmatprep.subr.bf16.mxu0 0
      %985 = vmatpush2.bf16.msra.mxu0 0
      %986 = vmatprep.subr.bf16.mxu0 0
      %987 = vmatpush2.bf16.msra.mxu0 0
      %988 = vmatprep.subr.bf16.mxu0 0
      %989 = vmatpush2.bf16.msra.mxu0 0
      %990 = vmatprep.subr.bf16.mxu0 0
      %991 = vmatpush2.bf16.msra.mxu0 0
      %992 = vmatprep.subr.bf16.mxu0 0
      %993 = vmatpush2.bf16.msra.mxu0 0
      %994 = vmatprep.subr.bf16.mxu0 0
      %995 = vmatpush2.bf16.msra.mxu0 0
      %996 = vmatprep.subr.bf16.mxu0 0
      %997 = vmatpush2.bf16.msra.mxu0 0
      %998 = vmatprep.subr.bf16.mxu0 0
      %999 = vmatpush2.bf16.msra.mxu0 0
      %1000 = vmatprep.mubr.bf16.mxu0 0
      %1001 = vmatmul.mubr.bf16.gmra.mxu0 %v887
      %v1002 = vpop.f32.mrf.mxu0
      %v1003 = vadd.f32 %v918, %v1002
      %v1004 = vpop.f32.mrf.mxu0
      %v1005 = vpop.f32.mrf.mxu0
      %v1006 = vadd.f32 %v918, %v1005
      %v1007 = vpop.f32.mrf.mxu0
      %1008 = vmatprep.mubr.bf16.mxu0 0
      %1009 = vmatmul.mubr.bf16.gmra.mxu0 %v888
      %v1010 = vpop.f32.mrf.mxu0
      %v1011 = vadd.f32 %v918, %v1010
      %v1012 = vpop.f32.mrf.mxu0
      %v1013 = vpop.f32.mrf.mxu0
      %v1014 = vadd.f32 %v918, %v1013
      %v1015 = vpop.f32.mrf.mxu0
      %1016 = vmatprep.mubr.bf16.mxu0 0
      %1017 = vmatmul.mubr.bf16.gmra.mxu0 %v889
      %v1018 = vpop.f32.mrf.mxu0
      %v1019 = vadd.f32 %v918, %v1018
      %v1020 = vpop.f32.mrf.mxu0
      %v1021 = vpop.f32.mrf.mxu0
      %v1022 = vadd.f32 %v918, %v1021
      %v1023 = vpop.f32.mrf.mxu0
      %1024 = vmatprep.mubr.bf16.mxu0 0
      %1025 = vmatmul.mubr.bf16.gmra.mxu0 %v890
      %v1026 = vpop.f32.mrf.mxu0
      %v1027 = vadd.f32 %v918, %v1026
      %v1028 = vpop.f32.mrf.mxu0
      %v1029 = vpop.f32.mrf.mxu0
      %v1030 = vadd.f32 %v918, %v1029
      %v1031 = vpop.f32.mrf.mxu0
      %1032 = vmatprep.mubr.bf16.mxu0 0
      %1033 = vmatmul.mubr.bf16.gmra.mxu0 %v891
      %v1034 = vpop.f32.mrf.mxu0
      %v1035 = vadd.f32 %v918, %v1034
      %v1036 = vpop.f32.mrf.mxu0
      %v1037 = vpop.f32.mrf.mxu0
      %v1038 = vadd.f32 %v918, %v1037
      %v1039 = vpop.f32.mrf.mxu0
      %1040 = vmatprep.mubr.bf16.mxu0 0
      %1041 = vmatmul.mubr.bf16.gmra.mxu0 %v892
      %v1042 = vpop.f32.mrf.mxu0
      %v1043 = vadd.f32 %v918, %v1042
      %v1044 = vpop.f32.mrf.mxu0
      %v1045 = vpop.f32.mrf.mxu0
      %v1046 = vadd.f32 %v918, %v1045
      %v1047 = vpop.f32.mrf.mxu0
      %1048 = vmatprep.mubr.bf16.mxu0 0
      %1049 = vmatmul.mubr.bf16.gmra.mxu0 %v893
      %v1050 = vpop.f32.mrf.mxu0
      %v1051 = vadd.f32 %v918, %v1050
      %v1052 = vpop.f32.mrf.mxu0
      %v1053 = vpop.f32.mrf.mxu0
      %v1054 = vadd.f32 %v918, %v1053
      %v1055 = vpop.f32.mrf.mxu0
      %1056 = vmatprep.mubr.bf16.mxu0 0
      %1057 = vmatmul.mubr.bf16.gmra.mxu0 %v894
      %v1058 = vpop.f32.mrf.mxu0
      %v1059 = vadd.f32 %v918, %v1058
      %v1060 = vpop.f32.mrf.mxu0
      %v1061 = vpop.f32.mrf.mxu0
      %v1062 = vadd.f32 %v918, %v1061
      %v1063 = vpop.f32.mrf.mxu0
      %1064 = vdwg.mxu0
      %v1065 = vmax.f32 %v1003, 0.0
      %v1066 = vmax.f32 %v1006, 0.0
      %v1067 = vmax.f32 %v1011, 0.0
      %v1068 = vmax.f32 %v1014, 0.0
      %v1069 = vmax.f32 %v1019, 0.0
      %v1070 = vmax.f32 %v1022, 0.0
      %v1071 = vmax.f32 %v1027, 0.0
      %v1072 = vmax.f32 %v1030, 0.0
      %v1073 = vmax.f32 %v1035, 0.0
      %v1074 = vmax.f32 %v1038, 0.0
      %v1075 = vmax.f32 %v1043, 0.0
      %v1076 = vmax.f32 %v1046, 0.0
      %v1077 = vmax.f32 %v1051, 0.0
      %v1078 = vmax.f32 %v1054, 0.0
      %v1079 = vmax.f32 %v1059, 0.0
      %v1080 = vmax.f32 %v1062, 0.0
      %v1081 = vadd.f32 %v1065, %v1066
      %v1082 = vadd.f32 %v1081, %v1067
      %v1083 = vadd.f32 %v1082, %v1068
      %v1084 = vadd.f32 %v1083, %v1069
      %v1085 = vadd.f32 %v1084, %v1070
      %v1086 = vadd.f32 %v1085, %v1071
      %v1087 = vadd.f32 %v1086, %v1072
      %v1088 = vadd.f32 %v1087, %v1073
      %v1089 = vadd.f32 %v1088, %v1074
      %v1090 = vadd.f32 %v1089, %v1075
      %v1091 = vadd.f32 %v1090, %v1076
      %v1092 = vadd.f32 %v1091, %v1077
      %v1093 = vadd.f32 %v1092, %v1078
      %v1094 = vadd.f32 %v1093, %v1079
      %v1095 = vadd.f32 %v1094, %v1080
      %v1096 = vrot.slane %v1095, 4
      %v1097 = vadd.f32 %v1095, %v1096
      %v1098 = vrot.slane %v1097, 2
      %v1099 = vadd.f32 %v1097, %v1098
      %v1100 = vrot.slane %v1099, 1
      %v1101 = vadd.f32 %v1099, %v1100
      %v1102 = vpack.c.bf16 %v1066, %v1065
      %v1103 = vpack.c.bf16 %v1068, %v1067
      %v1104 = vpack.c.bf16 %v1070, %v1069
      %v1105 = vpack.c.bf16 %v1072, %v1071
      %v1106 = vpack.c.bf16 %v1074, %v1073
      %v1107 = vpack.c.bf16 %v1076, %v1075
      %v1108 = vpack.c.bf16 %v1078, %v1077
      %v1109 = vpack.c.bf16 %v1080, %v1079
      %s1110 = scalar_lea.vmem %s2, 128
      %v1111 = vld [vmem:[%s1110] sm:$0xf]
      %v1112 = vld [vmem:[%s1110 + $0x4] sm:$0xf]
      %v1113 = vld [vmem:[%s1110 + $0x8] sm:$0xf]
      %v1114 = vld [vmem:[%s1110 + $0xc] sm:$0xf]
      %v1115 = vld [vmem:[%s1110 + $0x10] sm:$0xf]
      %v1116 = vld [vmem:[%s1110 + $0x14] sm:$0xf]
      %v1117 = vld [vmem:[%s1110 + $0x18] sm:$0xf]
      %v1118 = vld [vmem:[%s1110 + $0x1c] sm:$0xf]
      %v1119 = vld [vmem:[%s1110 + $0x20] sm:$0xf]
      %v1120 = vld [vmem:[%s1110 + $0x24] sm:$0xf]
      %v1121 = vld [vmem:[%s1110 + $0x28] sm:$0xf]
      %v1122 = vld [vmem:[%s1110 + $0x2c] sm:$0xf]
      %v1123 = vld [vmem:[%s1110 + $0x30] sm:$0xf]
      %v1124 = vld [vmem:[%s1110 + $0x34] sm:$0xf]
      %v1125 = vld [vmem:[%s1110 + $0x38] sm:$0xf]
      %v1126 = vld [vmem:[%s1110 + $0x3c] sm:$0xf]
      %s1127 = scalar_lea.vmem %s3, 3
      %v1128 = vld [vmem:[%s1127] sm:$0x1]
      %v1130 = vlaneseq
      %v1131 = vshrl.u32 %v1130, 7
      %v1132 = vsub.s32 0, %v1131
      %v1133 = vrot.slane %v1128, %v1132
      %v1151 = vunpack.c.l.b16 %v1111
      %v1152 = vunpack.c.l.b16 %v1112
      %v1153 = vunpack.c.l.b16 %v1113
      %v1154 = vunpack.c.l.b16 %v1114
      %v1155 = vunpack.c.l.b16 %v1115
      %v1156 = vunpack.c.l.b16 %v1116
      %v1157 = vunpack.c.l.b16 %v1117
      %v1158 = vunpack.c.l.b16 %v1118
      %v1159 = vunpack.c.l.b16 %v1119
      %v1160 = vunpack.c.l.b16 %v1120
      %v1161 = vunpack.c.l.b16 %v1121
      %v1162 = vunpack.c.l.b16 %v1122
      %v1163 = vunpack.c.l.b16 %v1123
      %v1164 = vunpack.c.l.b16 %v1124
      %v1165 = vunpack.c.l.b16 %v1125
      %v1166 = vunpack.c.l.b16 %v1126
      %v1167 = vpack.c.b16 %v1152, %v1151
      %v1168 = vpack.c.b16 %v1154, %v1153
      %v1169 = vpack.c.b16 %v1156, %v1155
      %v1170 = vpack.c.b16 %v1158, %v1157
      %v1171 = vpack.c.b16 %v1160, %v1159
      %v1172 = vpack.c.b16 %v1162, %v1161
      %v1173 = vpack.c.b16 %v1164, %v1163
      %v1174 = vpack.c.b16 %v1166, %v1165
      %1183 = vmatprep.subr.bf16.mxu0 0
      %1184 = vmatpush1.bf16.msra.mxu0 %v1174
      %1185 = vmatprep.subr.bf16.mxu0 0
      %1186 = vmatpush1.bf16.msra.mxu0 %v1173
      %1187 = vmatprep.subr.bf16.mxu0 0
      %1188 = vmatpush1.bf16.msra.mxu0 %v1172
      %1189 = vmatprep.subr.bf16.mxu0 0
      %1190 = vmatpush1.bf16.msra.mxu0 %v1171
      %1191 = vmatprep.subr.bf16.mxu0 0
      %1192 = vmatpush1.bf16.msra.mxu0 %v1170
      %1193 = vmatprep.subr.bf16.mxu0 0
      %1194 = vmatpush1.bf16.msra.mxu0 %v1169
      %1195 = vmatprep.subr.bf16.mxu0 0
      %1196 = vmatpush1.bf16.msra.mxu0 %v1168
      %1197 = vmatprep.subr.bf16.mxu0 0
      %1198 = vmatpush1.bf16.msra.mxu0 %v1167
      %1199 = vmatprep.subr.bf16.mxu0 0
      %1200 = vmatpush2.bf16.msra.mxu0 0
      %1201 = vmatprep.subr.bf16.mxu0 0
      %1202 = vmatpush2.bf16.msra.mxu0 0
      %1203 = vmatprep.subr.bf16.mxu0 0
      %1204 = vmatpush2.bf16.msra.mxu0 0
      %1205 = vmatprep.subr.bf16.mxu0 0
      %1206 = vmatpush2.bf16.msra.mxu0 0
      %1207 = vmatprep.subr.bf16.mxu0 0
      %1208 = vmatpush2.bf16.msra.mxu0 0
      %1209 = vmatprep.subr.bf16.mxu0 0
      %1210 = vmatpush2.bf16.msra.mxu0 0
      %1211 = vmatprep.subr.bf16.mxu0 0
      %1212 = vmatpush2.bf16.msra.mxu0 0
      %1213 = vmatprep.subr.bf16.mxu0 0
      %1214 = vmatpush2.bf16.msra.mxu0 0
      %1215 = vmatprep.mubr.bf16.mxu0 0
      %1216 = vmatmul.mubr.bf16.gmra.mxu0 %v1102
      %v1217 = vpop.f32.mrf.mxu0
      %v1218 = vadd.f32 %v1133, %v1217
      %v1219 = vpop.f32.mrf.mxu0
      %v1220 = vpop.f32.mrf.mxu0
      %v1221 = vadd.f32 %v1133, %v1220
      %v1222 = vpop.f32.mrf.mxu0
      %1223 = vmatprep.mubr.bf16.mxu0 0
      %1224 = vmatmul.mubr.bf16.gmra.mxu0 %v1103
      %v1225 = vpop.f32.mrf.mxu0
      %v1226 = vadd.f32 %v1133, %v1225
      %v1227 = vpop.f32.mrf.mxu0
      %v1228 = vpop.f32.mrf.mxu0
      %v1229 = vadd.f32 %v1133, %v1228
      %v1230 = vpop.f32.mrf.mxu0
      %1231 = vmatprep.mubr.bf16.mxu0 0
      %1232 = vmatmul.mubr.bf16.gmra.mxu0 %v1104
      %v1233 = vpop.f32.mrf.mxu0
      %v1234 = vadd.f32 %v1133, %v1233
      %v1235 = vpop.f32.mrf.mxu0
      %v1236 = vpop.f32.mrf.mxu0
      %v1237 = vadd.f32 %v1133, %v1236
      %v1238 = vpop.f32.mrf.mxu0
      %1239 = vmatprep.mubr.bf16.mxu0 0
      %1240 = vmatmul.mubr.bf16.gmra.mxu0 %v1105
      %v1241 = vpop.f32.mrf.mxu0
      %v1242 = vadd.f32 %v1133, %v1241
      %v1243 = vpop.f32.mrf.mxu0
      %v1244 = vpop.f32.mrf.mxu0
      %v1245 = vadd.f32 %v1133, %v1244
      %v1246 = vpop.f32.mrf.mxu0
      %1247 = vmatprep.mubr.bf16.mxu0 0
      %1248 = vmatmul.mubr.bf16.gmra.mxu0 %v1106
      %v1249 = vpop.f32.mrf.mxu0
      %v1250 = vadd.f32 %v1133, %v1249
      %v1251 = vpop.f32.mrf.mxu0
      %v1252 = vpop.f32.mrf.mxu0
      %v1253 = vadd.f32 %v1133, %v1252
      %v1254 = vpop.f32.mrf.mxu0
      %1255 = vmatprep.mubr.bf16.mxu0 0
      %1256 = vmatmul.mubr.bf16.gmra.mxu0 %v1107
      %v1257 = vpop.f32.mrf.mxu0
      %v1258 = vadd.f32 %v1133, %v1257
      %v1259 = vpop.f32.mrf.mxu0
      %v1260 = vpop.f32.mrf.mxu0
      %v1261 = vadd.f32 %v1133, %v1260
      %v1262 = vpop.f32.mrf.mxu0
      %1263 = vmatprep.mubr.bf16.mxu0 0
      %1264 = vmatmul.mubr.bf16.gmra.mxu0 %v1108
      %v1265 = vpop.f32.mrf.mxu0
      %v1266 = vadd.f32 %v1133, %v1265
      %v1267 = vpop.f32.mrf.mxu0
      %v1268 = vpop.f32.mrf.mxu0
      %v1269 = vadd.f32 %v1133, %v1268
      %v1270 = vpop.f32.mrf.mxu0
      %1271 = vmatprep.mubr.bf16.mxu0 0
      %1272 = vmatmul.mubr.bf16.gmra.mxu0 %v1109
      %v1273 = vpop.f32.mrf.mxu0
      %v1274 = vadd.f32 %v1133, %v1273
      %v1275 = vpop.f32.mrf.mxu0
      %v1276 = vpop.f32.mrf.mxu0
      %v1277 = vadd.f32 %v1133, %v1276
      %v1278 = vpop.f32.mrf.mxu0
      %1279 = vdwg.mxu0
      %v1280 = vmax.f32 %v1218, 0.0
      %v1281 = vmax.f32 %v1221, 0.0
      %v1282 = vmax.f32 %v1226, 0.0
      %v1283 = vmax.f32 %v1229, 0.0
      %v1284 = vmax.f32 %v1234, 0.0
      %v1285 = vmax.f32 %v1237, 0.0
      %v1286 = vmax.f32 %v1242, 0.0
      %v1287 = vmax.f32 %v1245, 0.0
      %v1288 = vmax.f32 %v1250, 0.0
      %v1289 = vmax.f32 %v1253, 0.0
      %v1290 = vmax.f32 %v1258, 0.0
      %v1291 = vmax.f32 %v1261, 0.0
      %v1292 = vmax.f32 %v1266, 0.0
      %v1293 = vmax.f32 %v1269, 0.0
      %v1294 = vmax.f32 %v1274, 0.0
      %v1295 = vmax.f32 %v1277, 0.0
      %v1296 = vadd.f32 %v1280, %v1281
      %v1297 = vadd.f32 %v1296, %v1282
      %v1298 = vadd.f32 %v1297, %v1283
      %v1299 = vadd.f32 %v1298, %v1284
      %v1300 = vadd.f32 %v1299, %v1285
      %v1301 = vadd.f32 %v1300, %v1286
      %v1302 = vadd.f32 %v1301, %v1287
      %v1303 = vadd.f32 %v1302, %v1288
      %v1304 = vadd.f32 %v1303, %v1289
      %v1305 = vadd.f32 %v1304, %v1290
      %v1306 = vadd.f32 %v1305, %v1291
      %v1307 = vadd.f32 %v1306, %v1292
      %v1308 = vadd.f32 %v1307, %v1293
      %v1309 = vadd.f32 %v1308, %v1294
      %v1310 = vadd.f32 %v1309, %v1295
      %v1311 = vrot.slane %v1310, 4
      %v1312 = vadd.f32 %v1310, %v1311
      %v1313 = vrot.slane %v1312, 2
      %v1314 = vadd.f32 %v1312, %v1313
      %v1315 = vrot.slane %v1314, 1
      %v1316 = vadd.f32 %v1314, %v1315
      %v1317 = vld [vmem:[#allocation2] sm:$0xf]
      %vm1318 = vcmask 1040384
      %v1319 = vsel %vm1318, %v672, %v886
      %v1320 = vsel %vm535, %v1319, %v1101
      %vm1321 = vcmask 1042432
      %v1322 = vsel %vm1321, %v1320, %v1316
      %v1323 = vadd.f32 %v1317, %v1322
      %1324 = vst [vmem:[#allocation2] sm:$0xf] %v1323
      %p1325 = scmp.eq.s32.totalorder %s30, 1
      // Predicated region
      $region73: #{threatened_model_forward.1} parent=67 // pred_check
        %p1326 = pneg %p1325
      $region74: #{threatened_model_forward.1} parent=67 // pred_check_branch
        %1328 = sbr.rel (%p1326) target = $region76
      $region75: #{threatened_model_forward.1} parent=67 // pred_region
        %v1329 = vld [vmem:[#allocation2] sm:$0xf]
        %v1330 = vmul.f32 %v1329, 0.00390625
        %v1331 = vld [vmem:[%s4] sm:$0xff]
        %v1332 = vld [vmem:[%s4 + $0x8] sm:$0xff]
        %v1333 = vld [vmem:[%s4 + $0x10] sm:$0xff]
        %v1334 = vld [vmem:[%s4 + $0x18] sm:$0xff]
        %v1335 = vld [vmem:[%s4 + $0x20] sm:$0xff]
        %v1336 = vld [vmem:[%s4 + $0x28] sm:$0xff]
        %v1337 = vld [vmem:[%s4 + $0x30] sm:$0xff]
        %v1338 = vld [vmem:[%s4 + $0x38] sm:$0xff]
        %v1339 = vld [vmem:[%s4 + $0x40] sm:$0xff]
        %v1340 = vld [vmem:[%s4 + $0x48] sm:$0xff]
        %v1341 = vld [vmem:[%s4 + $0x50] sm:$0xff]
        %v1342 = vld [vmem:[%s4 + $0x58] sm:$0xff]
        %v1343 = vld [vmem:[%s4 + $0x60] sm:$0xff]
        %v1344 = vld [vmem:[%s4 + $0x68] sm:$0xff]
        %v1345 = vld [vmem:[%s4 + $0x70] sm:$0xff]
        %v1346 = vld [vmem:[%s4 + $0x78] sm:$0xff]
        %1347 = vmatprep.subr.mxu0 0.0
        %1348 = vmatpush1.msra.mxu0 %v1346
        %1349 = vmatprep.subr.mxu0 0.0
        %1350 = vmatpush1.msra.mxu0 %v1345
        %1351 = vmatprep.subr.mxu0 0.0
        %1352 = vmatpush1.msra.mxu0 %v1344
        %1353 = vmatprep.subr.mxu0 0.0
        %1354 = vmatpush1.msra.mxu0 %v1343
        %1355 = vmatprep.subr.mxu0 0.0
        %1356 = vmatpush1.msra.mxu0 %v1342
        %1357 = vmatprep.subr.mxu0 0.0
        %1358 = vmatpush1.msra.mxu0 %v1341
        %1359 = vmatprep.subr.mxu0 0.0
        %1360 = vmatpush1.msra.mxu0 %v1340
        %1361 = vmatprep.subr.mxu0 0.0
        %1362 = vmatpush1.msra.mxu0 %v1339
        %1363 = vmatprep.subr.mxu0 0.0
        %1364 = vmatpush1.msra.mxu0 %v1338
        %1365 = vmatprep.subr.mxu0 0.0
        %1366 = vmatpush1.msra.mxu0 %v1337
        %1367 = vmatprep.subr.mxu0 0.0
        %1368 = vmatpush1.msra.mxu0 %v1336
        %1369 = vmatprep.subr.mxu0 0.0
        %1370 = vmatpush1.msra.mxu0 %v1335
        %1371 = vmatprep.subr.mxu0 0.0
        %1372 = vmatpush1.msra.mxu0 %v1334
        %1373 = vmatprep.subr.mxu0 0.0
        %1374 = vmatpush1.msra.mxu0 %v1333
        %1375 = vmatprep.subr.mxu0 0.0
        %1376 = vmatpush1.msra.mxu0 %v1332
        %1377 = vmatprep.subr.mxu0 0.0
        %1378 = vmatpush1.msra.mxu0 %v1331
        %1379 = vmatprep.subr.mxu0 0.0
        %1380 = vmatpush2.msra.mxu0 0.0
        %1381 = vmatprep.subr.mxu0 0.0
        %1382 = vmatpush2.msra.mxu0 0.0
        %1383 = vmatprep.subr.mxu0 0.0
        %1384 = vmatpush2.msra.mxu0 0.0
        %1385 = vmatprep.subr.mxu0 0.0
        %1386 = vmatpush2.msra.mxu0 0.0
        %1387 = vmatprep.subr.mxu0 0.0
        %1388 = vmatpush2.msra.mxu0 0.0
        %1389 = vmatprep.subr.mxu0 0.0
        %1390 = vmatpush2.msra.mxu0 0.0
        %1391 = vmatprep.subr.mxu0 0.0
        %1392 = vmatpush2.msra.mxu0 0.0
        %1393 = vmatprep.subr.mxu0 0.0
        %1394 = vmatpush2.msra.mxu0 0.0
        %1395 = vmatprep.subr.mxu0 0.0
        %1396 = vmatpush2.msra.mxu0 0.0
        %1397 = vmatprep.subr.mxu0 0.0
        %1398 = vmatpush2.msra.mxu0 0.0
        %1399 = vmatprep.subr.mxu0 0.0
        %1400 = vmatpush2.msra.mxu0 0.0
        %1401 = vmatprep.subr.mxu0 0.0
        %1402 = vmatpush2.msra.mxu0 0.0
        %1403 = vmatprep.subr.mxu0 0.0
        %1404 = vmatpush2.msra.mxu0 0.0
        %1405 = vmatprep.subr.mxu0 0.0
        %1406 = vmatpush2.msra.mxu0 0.0
        %1407 = vmatprep.subr.mxu0 0.0
        %1408 = vmatpush2.msra.mxu0 0.0
        %1409 = vmatprep.subr.mxu0 0.0
        %1410 = vmatpush2.msra.mxu0 0.0
        %1411 = vmatprep.mubr.f32.mxu0 0.0
        %1412 = vmatmul.mubr.f32.gmra.mxu0 %v1330
        %v1413 = vpop.f32.mrf.mxu0
        %v1414 = vadd.f32 0.0, %v1413
        %v1415 = vpop.f32.mrf.mxu0
        %1416 = vdwg.mxu0
        %v1417 = vld [vmem:[%s6] sm:$0x1]
        %v1419 = vlaneseq
        %v1420 = vshrl.u32 %v1419, 7
        %v1421 = vsub.s32 0, %v1420
        %v1422 = vrot.slane %v1417, %v1421
        %1423 = vrot.lane.b32.xlu0 %v1422, 64
        %v1424 = vpop.permute.xlu0 %1423
        %v1426 = vadd.f32 %v1414, %v1424
        %1428 = vrot.lane.b32.xlu0 %v1414, 112
        %v1429 = vpop.permute.xlu0 %1428
        %1431 = vrot.lane.b32.xlu0 %v1414, 96
        %v1432 = vpop.permute.xlu0 %1431
        %1434 = vrot.lane.b32.xlu0 %v1414, 80
        %v1435 = vpop.permute.xlu0 %1434
        %v1437 = vsel %vm1318, %v1414, %v1429
        %v1438 = vsel %vm535, %v1437, %v1432
        %v1439 = vsel %vm1321, %v1438, %v1435
        %v1440 = vmul.f32 %v1330, %v1330
        %vm1441 = vcmask 1043456
        %v1442 = vsel %vm1441, %v1440, 0.0
        %1443 = vadd.xlane.f32.xlu0 %v1442
        %v1444 = vpop.xlane.xlu0 %1443
        %v1445 = vld [vmem:[%s5] sm:$0xf]
        %v1446 = vadd.f32 %v1444, %v1445
        %v1447 = vmul.f32 %v1439, 2.0
        %v1448 = vsub.f32 %v1446, %v1447
        %v1449 = vmax.f32 %v1448, 0.0
        %v1450 = vrsqrt.pop %v1449
        %v1451 = vmul.f32 %v1449, %v1450
        %vm1452 = vcmp.eq.f32.partialorder %v1449, inf
        %v1453 = vsel %vm1452, %v1449, %v1451
        %vm1454 = vcmp.eq.f32.partialorder %v1449, 0.0
        %v1455 = vand.u32 %v1449, 2147483648
        %v1456 = vsel %vm1454, %v1455, %v1453
        %v1457 = vld [vmem:[%s7] sm:$0xff]
        %v1458 = vld [vmem:[%s7 + $0x8] sm:$0xff]
        %v1459 = vld [vmem:[%s9] sm:$0x1]
        %v1461 = vlaneseq
        %v1462 = vshrl.u32 %v1461, 7
        %v1463 = vsub.s32 0, %v1462
        %v1464 = vrot.slane %v1459, %v1463
        %vm1466 = vcmask 130048
        %v1468 = vsel %vm1466, %v1456, 0
        %1470 = vmatprep.subr.mxu0 0.0
        %1471 = vmatpush1.msra.mxu0 0.0
        %1472 = vmatprep.subr.mxu0 0.0
        %1473 = vmatpush1.msra.mxu0 0.0
        %1474 = vmatprep.subr.mxu0 0.0
        %1475 = vmatpush1.msra.mxu0 0.0
        %1476 = vmatprep.subr.mxu0 0.0
        %1477 = vmatpush1.msra.mxu0 0.0
        %1478 = vmatprep.subr.mxu0 0.0
        %1479 = vmatpush1.msra.mxu0 0.0
        %1480 = vmatprep.subr.mxu0 0.0
        %1481 = vmatpush1.msra.mxu0 0.0
        %1482 = vmatprep.subr.mxu0 0.0
        %1483 = vmatpush1.msra.mxu0 0.0
        %1484 = vmatprep.subr.mxu0 0.0
        %1485 = vmatpush1.msra.mxu0 0.0
        %1486 = vmatprep.subr.mxu0 0.0
        %1487 = vmatpush1.msra.mxu0 0.0
        %1488 = vmatprep.subr.mxu0 0.0
        %1489 = vmatpush1.msra.mxu0 0.0
        %1490 = vmatprep.subr.mxu0 0.0
        %1491 = vmatpush1.msra.mxu0 0.0
        %1492 = vmatprep.subr.mxu0 0.0
        %1493 = vmatpush1.msra.mxu0 0.0
        %1494 = vmatprep.subr.mxu0 0.0
        %1495 = vmatpush1.msra.mxu0 0.0
        %1496 = vmatprep.subr.mxu0 0.0
        %1497 = vmatpush1.msra.mxu0 0.0
        %1498 = vmatprep.subr.mxu0 0.0
        %1499 = vmatpush1.msra.mxu0 %v1458
        %1500 = vmatprep.subr.mxu0 0.0
        %1501 = vmatpush1.msra.mxu0 %v1457
        %1502 = vmatprep.subr.mxu0 0.0
        %1503 = vmatpush2.msra.mxu0 0.0
        %1504 = vmatprep.subr.mxu0 0.0
        %1505 = vmatpush2.msra.mxu0 0.0
        %1506 = vmatprep.subr.mxu0 0.0
        %1507 = vmatpush2.msra.mxu0 0.0
        %1508 = vmatprep.subr.mxu0 0.0
        %1509 = vmatpush2.msra.mxu0 0.0
        %1510 = vmatprep.subr.mxu0 0.0
        %1511 = vmatpush2.msra.mxu0 0.0
        %1512 = vmatprep.subr.mxu0 0.0
        %1513 = vmatpush2.msra.mxu0 0.0
        %1514 = vmatprep.subr.mxu0 0.0
        %1515 = vmatpush2.msra.mxu0 0.0
        %1516 = vmatprep.subr.mxu0 0.0
        %1517 = vmatpush2.msra.mxu0 0.0
        %1518 = vmatprep.subr.mxu0 0.0
        %1519 = vmatpush2.msra.mxu0 0.0
        %1520 = vmatprep.subr.mxu0 0.0
        %1521 = vmatpush2.msra.mxu0 0.0
        %1522 = vmatprep.subr.mxu0 0.0
        %1523 = vmatpush2.msra.mxu0 0.0
        %1524 = vmatprep.subr.mxu0 0.0
        %1525 = vmatpush2.msra.mxu0 0.0
        %1526 = vmatprep.subr.mxu0 0.0
        %1527 = vmatpush2.msra.mxu0 0.0
        %1528 = vmatprep.subr.mxu0 0.0
        %1529 = vmatpush2.msra.mxu0 0.0
        %1530 = vmatprep.subr.mxu0 0.0
        %1531 = vmatpush2.msra.mxu0 0.0
        %1532 = vmatprep.subr.mxu0 0.0
        %1533 = vmatpush2.msra.mxu0 0.0
        %1534 = vmatprep.mubr.f32.mxu0 0.0
        %1535 = vmatmul.mubr.f32.gmra.mxu0 %v1468
        %v1536 = vpop.f32.mrf.mxu0
        %v1537 = vadd.f32 %v1464, %v1536
        %v1538 = vpop.f32.mrf.mxu0
        %1539 = vdwg.mxu0
        %v1540 = vld [vmem:[%s8] sm:$0xff]
        %v1541 = vld [vmem:[%s8 + $0x8] sm:$0xff]
        %v1542 = vld [vmem:[%s8 + $0x10] sm:$0xff]
        %v1543 = vld [vmem:[%s8 + $0x18] sm:$0xff]
        %vm1544 = vcmask 261120
        %v1546 = vsel %vm1544, 0.0, 0
        %1548 = vmatprep.subr.mxu0 0.0
        %1549 = vmatpush1.msra.mxu0 0.0
        %1550 = vmatprep.subr.mxu0 0.0
        %1551 = vmatpush1.msra.mxu0 0.0
        %1552 = vmatprep.subr.mxu0 0.0
        %1553 = vmatpush1.msra.mxu0 0.0
        %1554 = vmatprep.subr.mxu0 0.0
        %1555 = vmatpush1.msra.mxu0 0.0
        %1556 = vmatprep.subr.mxu0 0.0
        %1557 = vmatpush1.msra.mxu0 0.0
        %1558 = vmatprep.subr.mxu0 0.0
        %1559 = vmatpush1.msra.mxu0 0.0
        %1560 = vmatprep.subr.mxu0 0.0
        %1561 = vmatpush1.msra.mxu0 0.0
        %1562 = vmatprep.subr.mxu0 0.0
        %1563 = vmatpush1.msra.mxu0 0.0
        %1564 = vmatprep.subr.mxu0 0.0
        %1565 = vmatpush1.msra.mxu0 0.0
        %1566 = vmatprep.subr.mxu0 0.0
        %1567 = vmatpush1.msra.mxu0 0.0
        %1568 = vmatprep.subr.mxu0 0.0
        %1569 = vmatpush1.msra.mxu0 0.0
        %1570 = vmatprep.subr.mxu0 0.0
        %1571 = vmatpush1.msra.mxu0 0.0
        %1572 = vmatprep.subr.mxu0 0.0
        %1573 = vmatpush1.msra.mxu0 %v1543
        %1574 = vmatprep.subr.mxu0 0.0
        %1575 = vmatpush1.msra.mxu0 %v1542
        %1576 = vmatprep.subr.mxu0 0.0
        %1577 = vmatpush1.msra.mxu0 %v1541
        %1578 = vmatprep.subr.mxu0 0.0
        %1579 = vmatpush1.msra.mxu0 %v1540
        %1580 = vmatprep.subr.mxu0 0.0
        %1581 = vmatpush2.msra.mxu0 0.0
        %1582 = vmatprep.subr.mxu0 0.0
        %1583 = vmatpush2.msra.mxu0 0.0
        %1584 = vmatprep.subr.mxu0 0.0
        %1585 = vmatpush2.msra.mxu0 0.0
        %1586 = vmatprep.subr.mxu0 0.0
        %1587 = vmatpush2.msra.mxu0 0.0
        %1588 = vmatprep.subr.mxu0 0.0
        %1589 = vmatpush2.msra.mxu0 0.0
        %1590 = vmatprep.subr.mxu0 0.0
        %1591 = vmatpush2.msra.mxu0 0.0
        %1592 = vmatprep.subr.mxu0 0.0
        %1593 = vmatpush2.msra.mxu0 0.0
        %1594 = vmatprep.subr.mxu0 0.0
        %1595 = vmatpush2.msra.mxu0 0.0
        %1596 = vmatprep.subr.mxu0 0.0
        %1597 = vmatpush2.msra.mxu0 0.0
        %1598 = vmatprep.subr.mxu0 0.0
        %1599 = vmatpush2.msra.mxu0 0.0
        %1600 = vmatprep.subr.mxu0 0.0
        %1601 = vmatpush2.msra.mxu0 0.0
        %1602 = vmatprep.subr.mxu0 0.0
        %1603 = vmatpush2.msra.mxu0 0.0
        %1604 = vmatprep.subr.mxu0 0.0
        %1605 = vmatpush2.msra.mxu0 0.0
        %1606 = vmatprep.subr.mxu0 0.0
        %1607 = vmatpush2.msra.mxu0 0.0
        %1608 = vmatprep.subr.mxu0 0.0
        %1609 = vmatpush2.msra.mxu0 0.0
        %1610 = vmatprep.subr.mxu0 0.0
        %1611 = vmatpush2.msra.mxu0 0.0
        %1612 = vmatprep.mubr.f32.mxu0 0.0
        %1613 = vmatmul.mubr.f32.gmra.mxu0 %v1546
        %v1614 = vpop.f32.mrf.mxu0
        %v1615 = vadd.f32 0.0, %v1614
        %v1616 = vpop.f32.mrf.mxu0
        %1617 = vdwg.mxu0
        %v1618 = vadd.f32 %v1537, %v1615
        %v1619 = vsub.f32 0.0, %v1618
        %v1620 = vmul.f32 %v1619, 1.442695
        %v1621 = vpow.pop %v1620
        %v1622 = vadd.f32 %v1621, 1.0
        %v1623 = vrcp.pop %v1622
        %v1624 = vtanh.pop %v1618
        %v1625 = vmul.f32 %v1623, 0.0
        %1627 = vrot.lane.b32.xlu0 %v1624, 64
        %v1628 = vpop.permute.xlu0 %1627
        %v1630 = vmul.f32 %v1623, %v1628
        %1632 = vrot.lane.b32.xlu0 %v1630, 32
        %v1633 = vpop.permute.xlu0 %1632
        %v1635 = vadd.f32 %v1625, %v1633
        %v1636 = vtanh.pop %v1635
        %1638 = vrot.lane.b32.xlu0 %v1636, 64
        %v1639 = vpop.permute.xlu0 %1638
        %v1641 = vmul.f32 %v1623, %v1639
        %1643 = vrot.lane.b32.xlu0 %v1641, 32
        %v1644 = vpop.permute.xlu0 %1643
        %v1645 = vsel %vm1544, %v1644, 0
        %1647 = vmatprep.subr.mxu0 0.0
        %1648 = vmatpush1.msra.mxu0 0.0
        %1649 = vmatprep.subr.mxu0 0.0
        %1650 = vmatpush1.msra.mxu0 0.0
        %1651 = vmatprep.subr.mxu0 0.0
        %1652 = vmatpush1.msra.mxu0 0.0
        %1653 = vmatprep.subr.mxu0 0.0
        %1654 = vmatpush1.msra.mxu0 0.0
        %1655 = vmatprep.subr.mxu0 0.0
        %1656 = vmatpush1.msra.mxu0 0.0
        %1657 = vmatprep.subr.mxu0 0.0
        %1658 = vmatpush1.msra.mxu0 0.0
        %1659 = vmatprep.subr.mxu0 0.0
        %1660 = vmatpush1.msra.mxu0 0.0
        %1661 = vmatprep.subr.mxu0 0.0
        %1662 = vmatpush1.msra.mxu0 0.0
        %1663 = vmatprep.subr.mxu0 0.0
        %1664 = vmatpush1.msra.mxu0 0.0
        %1665 = vmatprep.subr.mxu0 0.0
        %1666 = vmatpush1.msra.mxu0 0.0
        %1667 = vmatprep.subr.mxu0 0.0
        %1668 = vmatpush1.msra.mxu0 0.0
        %1669 = vmatprep.subr.mxu0 0.0
        %1670 = vmatpush1.msra.mxu0 0.0
        %1671 = vmatprep.subr.mxu0 0.0
        %1672 = vmatpush1.msra.mxu0 %v1543
        %1673 = vmatprep.subr.mxu0 0.0
        %1674 = vmatpush1.msra.mxu0 %v1542
        %1675 = vmatprep.subr.mxu0 0.0
        %1676 = vmatpush1.msra.mxu0 %v1541
        %1677 = vmatprep.subr.mxu0 0.0
        %1678 = vmatpush1.msra.mxu0 %v1540
        %1679 = vmatprep.subr.mxu0 0.0
        %1680 = vmatpush2.msra.mxu0 0.0
        %1681 = vmatprep.subr.mxu0 0.0
        %1682 = vmatpush2.msra.mxu0 0.0
        %1683 = vmatprep.subr.mxu0 0.0
        %1684 = vmatpush2.msra.mxu0 0.0
        %1685 = vmatprep.subr.mxu0 0.0
        %1686 = vmatpush2.msra.mxu0 0.0
        %1687 = vmatprep.subr.mxu0 0.0
        %1688 = vmatpush2.msra.mxu0 0.0
        %1689 = vmatprep.subr.mxu0 0.0
        %1690 = vmatpush2.msra.mxu0 0.0
        %1691 = vmatprep.subr.mxu0 0.0
        %1692 = vmatpush2.msra.mxu0 0.0
        %1693 = vmatprep.subr.mxu0 0.0
        %1694 = vmatpush2.msra.mxu0 0.0
        %1695 = vmatprep.subr.mxu0 0.0
        %1696 = vmatpush2.msra.mxu0 0.0
        %1697 = vmatprep.subr.mxu0 0.0
        %1698 = vmatpush2.msra.mxu0 0.0
        %1699 = vmatprep.subr.mxu0 0.0
        %1700 = vmatpush2.msra.mxu0 0.0
        %1701 = vmatprep.subr.mxu0 0.0
        %1702 = vmatpush2.msra.mxu0 0.0
        %1703 = vmatprep.subr.mxu0 0.0
        %1704 = vmatpush2.msra.mxu0 0.0
        %1705 = vmatprep.subr.mxu0 0.0
        %1706 = vmatpush2.msra.mxu0 0.0
        %1707 = vmatprep.subr.mxu0 0.0
        %1708 = vmatpush2.msra.mxu0 0.0
        %1709 = vmatprep.subr.mxu0 0.0
        %1710 = vmatpush2.msra.mxu0 0.0
        %1711 = vmatprep.mubr.f32.mxu0 0.0
        %1712 = vmatmul.mubr.f32.gmra.mxu0 %v1645
        %v1713 = vpop.f32.mrf.mxu0
        %v1714 = vadd.f32 0.0, %v1713
        %v1715 = vpop.f32.mrf.mxu0
        %1716 = vdwg.mxu0
        %v1718 = vrot.slane %v1714, 7
        %v1720 = vadd.f32 %v1537, %v1718
        %v1721 = vsub.f32 0.0, %v1720
        %v1722 = vmul.f32 %v1721, 1.442695
        %v1723 = vpow.pop %v1722
        %v1724 = vadd.f32 %v1723, 1.0
        %v1725 = vrcp.pop %v1724
        %v1726 = vtanh.pop %v1720
        %v1728 = vrot.slane %v1635, 7
        %v1730 = vmul.f32 %v1725, %v1728
        %1732 = vrot.lane.b32.xlu0 %v1726, 64
        %v1733 = vpop.permute.xlu0 %1732
        %v1735 = vmul.f32 %v1725, %v1733
        %1737 = vrot.lane.b32.xlu0 %v1735, 32
        %v1738 = vpop.permute.xlu0 %1737
        %v1740 = vadd.f32 %v1730, %v1738
        %v1741 = vtanh.pop %v1740
        %1743 = vrot.lane.b32.xlu0 %v1741, 64
        %v1744 = vpop.permute.xlu0 %1743
        %v1746 = vmul.f32 %v1725, %v1744
        %v1748 = vrot.slane %v1746, 1
        %1749 = vrot.lane.b32.xlu0 %v1748, 32
        %v1750 = vpop.permute.xlu0 %1749
        %v1751 = vsel %vm1544, %v1750, 0
        %1753 = vmatprep.subr.mxu0 0.0
        %1754 = vmatpush1.msra.mxu0 0.0
        %1755 = vmatprep.subr.mxu0 0.0
        %1756 = vmatpush1.msra.mxu0 0.0
        %1757 = vmatprep.subr.mxu0 0.0
        %1758 = vmatpush1.msra.mxu0 0.0
        %1759 = vmatprep.subr.mxu0 0.0
        %1760 = vmatpush1.msra.mxu0 0.0
        %1761 = vmatprep.subr.mxu0 0.0
        %1762 = vmatpush1.msra.mxu0 0.0
        %1763 = vmatprep.subr.mxu0 0.0
        %1764 = vmatpush1.msra.mxu0 0.0
        %1765 = vmatprep.subr.mxu0 0.0
        %1766 = vmatpush1.msra.mxu0 0.0
        %1767 = vmatprep.subr.mxu0 0.0
        %1768 = vmatpush1.msra.mxu0 0.0
        %1769 = vmatprep.subr.mxu0 0.0
        %1770 = vmatpush1.msra.mxu0 0.0
        %1771 = vmatprep.subr.mxu0 0.0
        %1772 = vmatpush1.msra.mxu0 0.0
        %1773 = vmatprep.subr.mxu0 0.0
        %1774 = vmatpush1.msra.mxu0 0.0
        %1775 = vmatprep.subr.mxu0 0.0
        %1776 = vmatpush1.msra.mxu0 0.0
        %1777 = vmatprep.subr.mxu0 0.0
        %1778 = vmatpush1.msra.mxu0 %v1543
        %1779 = vmatprep.subr.mxu0 0.0
        %1780 = vmatpush1.msra.mxu0 %v1542
        %1781 = vmatprep.subr.mxu0 0.0
        %1782 = vmatpush1.msra.mxu0 %v1541
        %1783 = vmatprep.subr.mxu0 0.0
        %1784 = vmatpush1.msra.mxu0 %v1540
        %1785 = vmatprep.subr.mxu0 0.0
        %1786 = vmatpush2.msra.mxu0 0.0
        %1787 = vmatprep.subr.mxu0 0.0
        %1788 = vmatpush2.msra.mxu0 0.0
        %1789 = vmatprep.subr.mxu0 0.0
        %1790 = vmatpush2.msra.mxu0 0.0
        %1791 = vmatprep.subr.mxu0 0.0
        %1792 = vmatpush2.msra.mxu0 0.0
        %1793 = vmatprep.subr.mxu0 0.0
        %1794 = vmatpush2.msra.mxu0 0.0
        %1795 = vmatprep.subr.mxu0 0.0
        %1796 = vmatpush2.msra.mxu0 0.0
        %1797 = vmatprep.subr.mxu0 0.0
        %1798 = vmatpush2.msra.mxu0 0.0
        %1799 = vmatprep.subr.mxu0 0.0
        %1800 = vmatpush2.msra.mxu0 0.0
        %1801 = vmatprep.subr.mxu0 0.0
        %1802 = vmatpush2.msra.mxu0 0.0
        %1803 = vmatprep.subr.mxu0 0.0
        %1804 = vmatpush2.msra.mxu0 0.0
        %1805 = vmatprep.subr.mxu0 0.0
        %1806 = vmatpush2.msra.mxu0 0.0
        %1807 = vmatprep.subr.mxu0 0.0
        %1808 = vmatpush2.msra.mxu0 0.0
        %1809 = vmatprep.subr.mxu0 0.0
        %1810 = vmatpush2.msra.mxu0 0.0
        %1811 = vmatprep.subr.mxu0 0.0
        %1812 = vmatpush2.msra.mxu0 0.0
        %1813 = vmatprep.subr.mxu0 0.0
        %1814 = vmatpush2.msra.mxu0 0.0
        %1815 = vmatprep.subr.mxu0 0.0
        %1816 = vmatpush2.msra.mxu0 0.0
        %1817 = vmatprep.mubr.f32.mxu0 0.0
        %1818 = vmatmul.mubr.f32.gmra.mxu0 %v1751
        %v1819 = vpop.f32.mrf.mxu0
        %v1820 = vadd.f32 0.0, %v1819
        %v1821 = vpop.f32.mrf.mxu0
        %1822 = vdwg.mxu0
        %v1824 = vrot.slane %v1820, 6
        %v1826 = vadd.f32 %v1537, %v1824
        %v1827 = vsub.f32 0.0, %v1826
        %v1828 = vmul.f32 %v1827, 1.442695
        %v1829 = vpow.pop %v1828
        %v1830 = vadd.f32 %v1829, 1.0
        %v1831 = vrcp.pop %v1830
        %v1832 = vtanh.pop %v1826
        %v1834 = vrot.slane %v1740, 7
        %v1836 = vmul.f32 %v1831, %v1834
        %1838 = vrot.lane.b32.xlu0 %v1832, 64
        %v1839 = vpop.permute.xlu0 %1838
        %v1841 = vmul.f32 %v1831, %v1839
        %1843 = vrot.lane.b32.xlu0 %v1841, 32
        %v1844 = vpop.permute.xlu0 %1843
        %v1846 = vadd.f32 %v1836, %v1844
        %v1847 = vtanh.pop %v1846
        %1849 = vrot.lane.b32.xlu0 %v1847, 64
        %v1850 = vpop.permute.xlu0 %1849
        %v1852 = vmul.f32 %v1831, %v1850
        %v1854 = vrot.slane %v1852, 2
        %1855 = vrot.lane.b32.xlu0 %v1854, 32
        %v1856 = vpop.permute.xlu0 %1855
        %v1857 = vsel %vm1544, %v1856, 0
        %1859 = vmatprep.subr.mxu0 0.0
        %1860 = vmatpush1.msra.mxu0 0.0
        %1861 = vmatprep.subr.mxu0 0.0
        %1862 = vmatpush1.msra.mxu0 0.0
        %1863 = vmatprep.subr.mxu0 0.0
        %1864 = vmatpush1.msra.mxu0 0.0
        %1865 = vmatprep.subr.mxu0 0.0
        %1866 = vmatpush1.msra.mxu0 0.0
        %1867 = vmatprep.subr.mxu0 0.0
        %1868 = vmatpush1.msra.mxu0 0.0
        %1869 = vmatprep.subr.mxu0 0.0
        %1870 = vmatpush1.msra.mxu0 0.0
        %1871 = vmatprep.subr.mxu0 0.0
        %1872 = vmatpush1.msra.mxu0 0.0
        %1873 = vmatprep.subr.mxu0 0.0
        %1874 = vmatpush1.msra.mxu0 0.0
        %1875 = vmatprep.subr.mxu0 0.0
        %1876 = vmatpush1.msra.mxu0 0.0
        %1877 = vmatprep.subr.mxu0 0.0
        %1878 = vmatpush1.msra.mxu0 0.0
        %1879 = vmatprep.subr.mxu0 0.0
        %1880 = vmatpush1.msra.mxu0 0.0
        %1881 = vmatprep.subr.mxu0 0.0
        %1882 = vmatpush1.msra.mxu0 0.0
        %1883 = vmatprep.subr.mxu0 0.0
        %1884 = vmatpush1.msra.mxu0 %v1543
        %1885 = vmatprep.subr.mxu0 0.0
        %1886 = vmatpush1.msra.mxu0 %v1542
        %1887 = vmatprep.subr.mxu0 0.0
        %1888 = vmatpush1.msra.mxu0 %v1541
        %1889 = vmatprep.subr.mxu0 0.0
        %1890 = vmatpush1.msra.mxu0 %v1540
        %1891 = vmatprep.subr.mxu0 0.0
        %1892 = vmatpush2.msra.mxu0 0.0
        %1893 = vmatprep.subr.mxu0 0.0
        %1894 = vmatpush2.msra.mxu0 0.0
        %1895 = vmatprep.subr.mxu0 0.0
        %1896 = vmatpush2.msra.mxu0 0.0
        %1897 = vmatprep.subr.mxu0 0.0
        %1898 = vmatpush2.msra.mxu0 0.0
        %1899 = vmatprep.subr.mxu0 0.0
        %1900 = vmatpush2.msra.mxu0 0.0
        %1901 = vmatprep.subr.mxu0 0.0
        %1902 = vmatpush2.msra.mxu0 0.0
        %1903 = vmatprep.subr.mxu0 0.0
        %1904 = vmatpush2.msra.mxu0 0.0
        %1905 = vmatprep.subr.mxu0 0.0
        %1906 = vmatpush2.msra.mxu0 0.0
        %1907 = vmatprep.subr.mxu0 0.0
        %1908 = vmatpush2.msra.mxu0 0.0
        %1909 = vmatprep.subr.mxu0 0.0
        %1910 = vmatpush2.msra.mxu0 0.0
        %1911 = vmatprep.subr.mxu0 0.0
        %1912 = vmatpush2.msra.mxu0 0.0
        %1913 = vmatprep.subr.mxu0 0.0
        %1914 = vmatpush2.msra.mxu0 0.0
        %1915 = vmatprep.subr.mxu0 0.0
        %1916 = vmatpush2.msra.mxu0 0.0
        %1917 = vmatprep.subr.mxu0 0.0
        %1918 = vmatpush2.msra.mxu0 0.0
        %1919 = vmatprep.subr.mxu0 0.0
        %1920 = vmatpush2.msra.mxu0 0.0
        %1921 = vmatprep.subr.mxu0 0.0
        %1922 = vmatpush2.msra.mxu0 0.0
        %1923 = vmatprep.mubr.f32.mxu0 0.0
        %1924 = vmatmul.mubr.f32.gmra.mxu0 %v1857
        %v1925 = vpop.f32.mrf.mxu0
        %v1926 = vadd.f32 0.0, %v1925
        %v1927 = vpop.f32.mrf.mxu0
        %1928 = vdwg.mxu0
        %v1930 = vrot.slane %v1926, 5
        %v1932 = vadd.f32 %v1537, %v1930
        %v1933 = vsub.f32 0.0, %v1932
        %v1934 = vmul.f32 %v1933, 1.442695
        %v1935 = vpow.pop %v1934
        %v1936 = vadd.f32 %v1935, 1.0
        %v1937 = vrcp.pop %v1936
        %v1938 = vtanh.pop %v1932
        %v1940 = vrot.slane %v1846, 7
        %v1942 = vmul.f32 %v1937, %v1940
        %1944 = vrot.lane.b32.xlu0 %v1938, 64
        %v1945 = vpop.permute.xlu0 %1944
        %v1947 = vmul.f32 %v1937, %v1945
        %1949 = vrot.lane.b32.xlu0 %v1947, 32
        %v1950 = vpop.permute.xlu0 %1949
        %v1952 = vadd.f32 %v1942, %v1950
        %v1953 = vtanh.pop %v1952
        %1955 = vrot.lane.b32.xlu0 %v1953, 64
        %v1956 = vpop.permute.xlu0 %1955
        %v1958 = vmul.f32 %v1937, %v1956
        %v1959 = vld [vmem:[%s10] sm:$0x1]
        %v1961 = vlaneseq
        %v1962 = vshrl.u32 %v1961, 7
        %v1963 = vsub.s32 0, %v1962
        %v1964 = vrot.slane %v1959, %v1963
        %1965 = vrot.lane.b32.xlu0 %v1964, 96
        %v1966 = vpop.permute.xlu0 %1965
        %v1968 = vmul.f32 %v1958, %v1966
        %1970 = vrot.lane.b32.xlu0 %v1968, 32
        %v1971 = vpop.permute.xlu0 %1970
        %vm1973 = vcmask 257027
        %v1974 = vsel %vm1973, %v1971, 0.0
        %1975 = vadd.xlane.f32.xlu0 %v1974
        %v1976 = vpop.xlane.xlu0 %1975
        %v1977 = vld [vmem:[#allocation3] sm:$0x1]
        %v1979 = vlaneseq
        %v1980 = vshrl.u32 %v1979, 7
        %v1981 = vsub.s32 0, %v1980
        %v1982 = vrot.slane %v1977, %v1981
        %v1984 = vadd.f32 %v1976, %v1982
        %1986 = vrot.lane.b32.xlu0 %v1426, 64
        %v1987 = vpop.permute.xlu0 %1986
        %1990 = vrot.lane.b32.xlu0 %v1984, 16
        %v1991 = vpop.permute.xlu0 %1990
        %v1993 = vsel %vm1466, %v1987, %v1991
        %vm1994 = vcmask 138240
        %v1995 = vsel %vm1994, %v1993, 0.0
        %1996 = vst [vmem:[%s439 - $0x3] sm:$0x8] %v1995
      $region76: #{threatened_model_forward.1} parent=67 // pred_fallthru
        _
      %p1997 = scmp.lt.s32.totalorder %s29, 1
      %s1998 = scalar_select %p1997, %s29, 1
      %s1999 = scalar_lea.vmem %s12, %s1998
      // Predicated region
      $region77: #{threatened_model_forward.1} parent=67 // pred_check
        %p2000 = pneg %p314
      $region78: #{threatened_model_forward.1} parent=67 // pred_check_branch
        %2002 = sbr.rel (%p2000) target = $region80
      $region79: #{threatened_model_forward.1} parent=67 // pred_region
        _
      $region80: #{threatened_model_forward.1} parent=67 // pred_fallthru
        _
    $region68: #{threatened_model_forward.1} parent=5 // pred_fallthru
      _
    %p2003 = scmp.le.s32.totalorder 2, %s20
    // Predicated region
    $region81: #{threatened_model_forward.1} parent=5 // pred_check
      %p2004 = pneg %p2003
    $region82: #{threatened_model_forward.1} parent=5 // pred_check_branch
      %2006 = sbr.rel (%p2004) target = $region84
    $region83: #{threatened_model_forward.1} parent=5 // pred_region
      %s2007 = ssub.s32 %s20, 2
      // Predicated region
      $region85: #{threatened_model_forward.1} parent=83 // pred_check
        %p2008 = pneg %p320
      $region86: #{threatened_model_forward.1} parent=83 // pred_check_branch
        %2010 = sbr.rel (%p2008) target = $region88
      $region87: #{threatened_model_forward.1} parent=83 // pred_region
        %p2011 = scmp.lt.s32.totalorder %s31, 1
        %s2012 = scalar_select %p2011, %s31, 1
        %s2013 = scalar_lea.vmem %s12, %s2012
      $region88: #{threatened_model_forward.1} parent=83 // pred_fallthru
        _
    $region84: #{threatened_model_forward.1} parent=5 // pred_fallthru
      _
  $region6: #{threatened_model_forward.1} parent=0 // loop_footer
    %s24 = sadd.s32 1, %s20
  $region7: #{threatened_model_forward.1} parent=0 // loop_footer_branch
    %19 = sbr.rel target = $region3
  $region8: #{threatened_model_forward.1} parent=0 // loop_exit
    _

</llo_original>
